<compile_context>
chip_gen: v7x
topology: tpu7x:2x2x1
jax: 0.10.0
libtpu: 0.0.40
codegen_flags: <defaults>
</compile_context>

<pallas_src>
import functools

import jax
import jax.numpy as jnp
from jax import lax
from jax.experimental import pallas as pl
from jax.experimental.pallas import tpu as pltpu

_LANE = 128
_BF16_ROW = 16   # bf16 min tile is (16, 128)


def _round_up(v, m):
    return ((v + m - 1) // m) * m


def _pad2d(a, rows, cols):
    return jnp.pad(a, ((0, rows - a.shape[0]), (0, cols - a.shape[1])))


def _mean_aggregate(src_col, tgt_row, inv_deg, feats_bf16, n_src, n_tgt):
    """Mean neighbor aggregation straight from edge lists (no dense A in HBM).

    src_col    : [E, 1] int32 source indices (padded edges hold -1)
    tgt_row    : [1, E] int32 target indices (padded edges hold -1)
    inv_deg    : [n_tgt, 1] f32 precomputed 1/max(deg, 1)
    feats_bf16 : [n_src, F] bf16 source features
    Returns [n_tgt, F] f32 mean over incoming edges per target.
    """
    n_edge = src_col.shape[0]
    # One-hot matrices built directly in bf16 (single VPU pass, no f32 copy).
    # Padded edges (-1) produce all-zero rows/cols -> no contribution.
    s_oh = (src_col == lax.broadcasted_iota(jnp.int32, (n_edge, n_src), 1)
            ).astype(jnp.bfloat16)                         # [E, n_src]
    t_oh = (tgt_row == lax.broadcasted_iota(jnp.int32, (n_tgt, n_edge), 0)
            ).astype(jnp.bfloat16)                         # [n_tgt, E]
    # xe[e, :] = feats[src[e], :]  (gather expressed as an MXU matmul)
    xe = jnp.dot(s_oh, feats_bf16, preferred_element_type=jnp.float32)
    # agg_sum[t, :] = sum_{e : tgt[e]==t} xe[e, :]  (segment-sum as a matmul)
    agg_sum = jnp.dot(t_oh, xe.astype(jnp.bfloat16),
                      preferred_element_type=jnp.float32)
    return agg_sum * inv_deg                               # VPU mul only


def _sage_net_kernel(src1_ref, tgt1_ref, inv1_ref, src2_ref, tgt2_ref, inv2_ref,
                     x_ref, w1l_ref, w1r_ref, b1_ref, w2l_ref, w2r_ref, b2_ref,
                     o_ref, *, n1_pad, n2_pad, num_classes):
    """Fused 2-layer GraphSAGE forward.

    x_ref   : [n0p, Fin_p]   bf16 source features (targets are the first rows)
    w*l/w*r : [Fin_p, Fout_p] bf16 neighbor / root weights (pre-transposed)
    b*_ref  : [1, Fout_p]    f32 lin_l bias (lin_r has no bias, per PyG)
    inv*_ref: [n_tgt_p, 1]   f32 precomputed inverse degrees
    o_ref   : [n2p, C_p]     f32 log-probabilities (padded lanes masked)
    """
    x = x_ref[...]                                   # [n0p, Fin_p] bf16
    n0p = x.shape[0]

    # ------------- layer 0: SAGEConv + ReLU -------------
    agg1 = _mean_aggregate(src1_ref[...], tgt1_ref[...], inv1_ref[...],
                           x, n0p, n1_pad)
    x_tgt = x[:n1_pad, :]                            # bipartite: first rows
    z1 = (jnp.dot(agg1.astype(jnp.bfloat16), w1l_ref[...],
                  preferred_element_type=jnp.float32)
          + jnp.dot(x_tgt, w1r_ref[...], preferred_element_type=jnp.float32)
          + b1_ref[...])
    h = jnp.maximum(z1, 0.0)                         # [n1p, H_p] f32
    # TODO(synk): F.dropout(p=0.5) skipped (eval-mode identity).
    h_bf16 = h.astype(jnp.bfloat16)

    # ------------- layer 1: SAGEConv + log_softmax -------------
    agg2 = _mean_aggregate(src2_ref[...], tgt2_ref[...], inv2_ref[...],
                           h_bf16, n1_pad, n2_pad)
    h_tgt = h_bf16[:n2_pad, :]
    z2 = (jnp.dot(agg2.astype(jnp.bfloat16), w2l_ref[...],
                  preferred_element_type=jnp.float32)
          + jnp.dot(h_tgt, w2r_ref[...], preferred_element_type=jnp.float32)
          + b2_ref[...])

    # log_softmax over the real (unpadded) class lanes only; f32 epilogue.
    col = lax.broadcasted_iota(jnp.int32, z2.shape, 1)
    logits = jnp.where(col < num_classes, z2, -1e30)
    m = jnp.max(logits, axis=-1, keepdims=True)
    lse = m + jnp.log(jnp.sum(jnp.exp(logits - m), axis=-1, keepdims=True))
    o_ref[...] = (logits - lse).astype(o_ref.dtype)


def sage_net_forward(x, adjs, params):
    """adjs: [(edge_index[2, E], (num_source, num_target))] for the 2 layers."""
    assert len(adjs) == 2 and len(params) == 2
    (ei1, (n0, n1)), (ei2, (_, n2)) = adjs
    (w1l, w1r, b1), (w2l, w2r, b2) = params
    f_in, hidden = w1l.shape
    num_classes = w2l.shape[1]

    # PyG bipartite convention: target nodes are the first rows of x.
    assert n1 <= n0 and n2 <= n1, "SageNet expects n_target <= n_source per layer"

    # Padded extents: 128 for lane / MXU-contraction dims, 16 for bf16 rows.
    n0p = _round_up(n0, _LANE)       # lane dim of s_oh1 / K of gather matmul 1
    n1p = _round_up(n1, _LANE)       # lane dim of s_oh2 / K of gather matmul 2
    n2p = _round_up(n2, _BF16_ROW)   # row dim only (output rows, bf16 slice)
    finp = _round_up(f_in, _LANE)
    hidp = _round_up(hidden, _LANE)
    clsp = _round_up(num_classes, _LANE)

    def pad_edges(ei):
        e = ei.shape[1]
        ep = _round_up(e, _LANE)     # lane dim of t_oh / K of segment-sum matmul
        src = jnp.pad(ei[0].astype(jnp.int32), (0, ep - e), constant_values=-1)
        tgt = jnp.pad(ei[1].astype(jnp.int32), (0, ep - e), constant_values=-1)
        return src.reshape(ep, 1), tgt.reshape(1, ep), ep

    def inv_degrees(ei, n_tgt_pad):
        deg = jnp.zeros((n_tgt_pad,), jnp.float32).at[ei[1]].add(1.0)
        return (1.0 / jnp.maximum(deg, 1.0)).reshape(n_tgt_pad, 1)

    src1, tgt1, e1p = pad_edges(ei1)
    src2, tgt2, e2p = pad_edges(ei2)
    inv1 = inv_degrees(ei1, n1p)
    inv2 = inv_degrees(ei2, n2p)

    x_p = _pad2d(x, n0p, finp).astype(jnp.bfloat16)
    w1l_p = _pad2d(w1l, finp, hidp).astype(jnp.bfloat16)
    w1r_p = _pad2d(w1r, finp, hidp).astype(jnp.bfloat16)
    w2l_p = _pad2d(w2l, hidp, clsp).astype(jnp.bfloat16)
    w2r_p = _pad2d(w2r, hidp, clsp).astype(jnp.bfloat16)
    b1p = _pad2d(b1, 1, hidp).astype(jnp.float32)
    b2p = _pad2d(b2, 1, clsp).astype(jnp.float32)

    # Advisory cost estimate (gather + segment-sum + 2 linears per layer).
    flops = 2 * (e1p * n0p * finp + n1p * e1p * finp + 2 * n1p * finp * hidp
                 + e2p * n1p * hidp + n2p * e2p * hidp + 2 * n2p * hidp * clsp)
    bytes_accessed = (4 * (2 * e1p + 2 * e2p + n1p + n2p + hidp + clsp)
                      + 2 * (n0p * finp + 2 * finp * hidp + 2 * hidp * clsp)
                      + 4 * n2p * clsp)
    cost = pl.CostEstimate(flops=int(flops),
                           transcendentals=int(n2p * clsp + n2p),
                           bytes_accessed=int(bytes_accessed))

    kernel = functools.partial(_sage_net_kernel, n1_pad=n1p, n2_pad=n2p,
                               num_classes=num_classes)
    vmem = pl.BlockSpec(memory_space=pltpu.MemorySpace.VMEM)
    out = pl.pallas_call(
        kernel,
        out_shape=jax.ShapeDtypeStruct((n2p, clsp), jnp.float32),
        in_specs=[vmem] * 13,
        out_specs=vmem,
        compiler_params=pltpu.CompilerParams(
            vmem_limit_bytes=32 * 1024 * 1024),
        cost_estimate=cost,
    )(src1, tgt1, inv1, src2, tgt2, inv2,
      x_p, w1l_p, w1r_p, b1p, w2l_p, w2r_p, b2p)
    return out[:n2, :num_classes]


def init_sage_net_params(key, in_channels, hidden_channels, out_channels):
    """Deterministic init. Per PyG SAGEConv: lin_l has bias, lin_r has none.
    Weights stored pre-transposed as [Fin, Fout]."""
    dims = [(in_channels, hidden_channels), (hidden_channels, out_channels)]
    params = []
    for fin, fout in dims:
        k_l, k_r, key = jax.random.split(key, 3)
        scale = 1.0 / jnp.sqrt(jnp.float32(fin))
        w_l = jax.random.normal(k_l, (fin, fout), jnp.float32) * scale
        w_r = jax.random.normal(k_r, (fin, fout), jnp.float32) * scale
        b = jnp.zeros((1, fout), jnp.float32)
        params.append((w_l, w_r, b))
    return params


def _reference_forward(x, adjs, params):
    """Pure-JAX f32 reference (XLA scatter is fine here: test-only)."""
    h = x
    n_layers = len(adjs)
    for i, (ei, (_, n_tgt)) in enumerate(adjs):
        src, tgt = ei[0], ei[1]
        w_l, w_r, b = params[i]
        agg_sum = jnp.zeros((n_tgt, h.shape[1]), jnp.float32).at[tgt].add(h[src])
        deg = jnp.zeros((n_tgt, 1), jnp.float32).at[tgt].add(1.0)
        agg = agg_sum / jnp.maximum(deg, 1.0)
        h = agg @ w_l + h[:n_tgt] @ w_r + b
        if i != n_layers - 1:
            h = jnp.maximum(h, 0.0)
    return jax.nn.log_softmax(h, axis=-1)


if __name__ == "__main__":
    key = jax.random.PRNGKey(0)
    k_x, k_e1s, k_e1t, k_e2s, k_e2t, k_p = jax.random.split(key, 6)

    in_channels, hidden_channels, out_channels = 8, 32, 16
    n0, n1, n2 = 16, 8, 4        # source nodes, layer-1 targets, layer-2 targets
    e1, e2 = 48, 24              # edges per sampled bipartite graph

    x = jax.random.normal(k_x, (n0, in_channels), jnp.float32)
    edge_index_1 = jnp.stack([
        jax.random.randint(k_e1s, (e1,), 0, n0),   # sources in [0, n0)
        jax.random.randint(k_e1t, (e1,), 0, n1),   # targets in [0, n1)
    ]).astype(jnp.int32)
    edge_index_2 = jnp.stack([
        jax.random.randint(k_e2s, (e2,), 0, n1),
        jax.random.randint(k_e2t, (e2,), 0, n2),
    ]).astype(jnp.int32)

    adjs = [(edge_index_1, (n0, n1)), (edge_index_2, (n1, n2))]
    params = init_sage_net_params(k_p, in_channels, hidden_channels,
                                  out_channels)

    out = jax.block_until_ready(sage_net_forward(x, adjs, params))
    assert out.shape == (n2, out_channels)
    # log_softmax rows must normalize in probability space.
    assert jnp.allclose(jnp.sum(jnp.exp(out), axis=-1), 1.0, atol=1e-4)
    # bf16-MXU fused kernel vs f32 XLA reference.
    ref = _reference_forward(x, adjs, params)
    assert jnp.allclose(out, ref, atol=1e-1), float(jnp.max(jnp.abs(out - ref)))
    print("KERNEL_OK")
</pallas_src>

<mosaic_0001>
module attributes {stable_mosaic.version = 11 : i64} {
  func.func @_sage_net_kernel(%arg0: memref<128x1xi32, #tpu.memory_space<vmem>>, %arg1: memref<1x128xi32, #tpu.memory_space<vmem>>, %arg2: memref<128x1xf32, #tpu.memory_space<vmem>>, %arg3: memref<128x1xi32, #tpu.memory_space<vmem>>, %arg4: memref<1x128xi32, #tpu.memory_space<vmem>>, %arg5: memref<16x1xf32, #tpu.memory_space<vmem>>, %arg6: memref<128x128xbf16, #tpu.memory_space<vmem>>, %arg7: memref<128x128xbf16, #tpu.memory_space<vmem>>, %arg8: memref<128x128xbf16, #tpu.memory_space<vmem>>, %arg9: memref<1x128xf32, #tpu.memory_space<vmem>>, %arg10: memref<128x128xbf16, #tpu.memory_space<vmem>>, %arg11: memref<128x128xbf16, #tpu.memory_space<vmem>>, %arg12: memref<1x128xf32, #tpu.memory_space<vmem>>, %arg13: memref<16x128xf32, #tpu.memory_space<vmem>>) attributes {dimension_semantics = [], scalar_prefetch = 0 : i64, scratch_operands = 0 : i64, tpu.core_type = #tpu.core_type<tc>} {
    %c0 = arith.constant 0 : index
    %c0_0 = arith.constant 0 : index
    %0 = vector.load %arg6[%c0, %c0_0] : memref<128x128xbf16, #tpu.memory_space<vmem>>, vector<128x128xbf16>
    %c0_1 = arith.constant 0 : index
    %c0_2 = arith.constant 0 : index
    %1 = vector.load %arg0[%c0_1, %c0_2] : memref<128x1xi32, #tpu.memory_space<vmem>>, vector<128x1xi32>
    %c0_3 = arith.constant 0 : index
    %c0_4 = arith.constant 0 : index
    %2 = vector.load %arg1[%c0_3, %c0_4] : memref<1x128xi32, #tpu.memory_space<vmem>>, vector<1x128xi32>
    %c0_5 = arith.constant 0 : index
    %c0_6 = arith.constant 0 : index
    %3 = vector.load %arg2[%c0_5, %c0_6] : memref<128x1xf32, #tpu.memory_space<vmem>>, vector<128x1xf32>
    %4 = tpu.iota {dimensions = array<i32: 1>} : vector<128x128xi32>
    %5 = vector.broadcast %1 : vector<128x1xi32> to vector<128x128xi32>
    %6 = arith.cmpi eq, %5, %4 : vector<128x128xi32>
    %7 = arith.extui %6 : vector<128x128xi1> to vector<128x128xi32>
    %8 = arith.sitofp %7 : vector<128x128xi32> to vector<128x128xf32>
    %9 = arith.truncf %8 : vector<128x128xf32> to vector<128x128xbf16>
    %10 = tpu.iota {dimensions = array<i32: 0>} : vector<128x128xi32>
    %11 = vector.broadcast %2 : vector<1x128xi32> to vector<128x128xi32>
    %12 = arith.cmpi eq, %11, %10 : vector<128x128xi32>
    %13 = arith.extui %12 : vector<128x128xi1> to vector<128x128xi32>
    %14 = arith.sitofp %13 : vector<128x128xi32> to vector<128x128xf32>
    %15 = arith.truncf %14 : vector<128x128xf32> to vector<128x128xbf16>
    %cst = arith.constant dense<0.000000e+00> : vector<128x128xf32>
    %16 = tpu.matmul %9, %0, %cst {dimension_numbers = #tpu.dot_dimension_numbers<[1], [0], [0], [1], [0, 0, 1, 1], [], []>} : vector<128x128xbf16>, vector<128x128xbf16>, vector<128x128xf32> -> vector<128x128xf32>
    %17 = arith.truncf %16 : vector<128x128xf32> to vector<128x128xbf16>
    %cst_7 = arith.constant dense<0.000000e+00> : vector<128x128xf32>
    %18 = tpu.matmul %15, %17, %cst_7 {dimension_numbers = #tpu.dot_dimension_numbers<[1], [0], [0], [1], [0, 0, 1, 1], [], []>} : vector<128x128xbf16>, vector<128x128xbf16>, vector<128x128xf32> -> vector<128x128xf32>
    %19 = vector.broadcast %3 : vector<128x1xf32> to vector<128x128xf32>
    %20 = arith.mulf %18, %19 : vector<128x128xf32>
    %21 = arith.truncf %20 : vector<128x128xf32> to vector<128x128xbf16>
    %c0_8 = arith.constant 0 : index
    %c0_9 = arith.constant 0 : index
    %22 = vector.load %arg7[%c0_8, %c0_9] : memref<128x128xbf16, #tpu.memory_space<vmem>>, vector<128x128xbf16>
    %cst_10 = arith.constant dense<0.000000e+00> : vector<128x128xf32>
    %23 = tpu.matmul %21, %22, %cst_10 {dimension_numbers = #tpu.dot_dimension_numbers<[1], [0], [0], [1], [0, 0, 1, 1], [], []>} : vector<128x128xbf16>, vector<128x128xbf16>, vector<128x128xf32> -> vector<128x128xf32>
    %c0_11 = arith.constant 0 : index
    %c0_12 = arith.constant 0 : index
    %24 = vector.load %arg8[%c0_11, %c0_12] : memref<128x128xbf16, #tpu.memory_space<vmem>>, vector<128x128xbf16>
    %cst_13 = arith.constant dense<0.000000e+00> : vector<128x128xf32>
    %25 = tpu.matmul %0, %24, %cst_13 {dimension_numbers = #tpu.dot_dimension_numbers<[1], [0], [0], [1], [0, 0, 1, 1], [], []>} : vector<128x128xbf16>, vector<128x128xbf16>, vector<128x128xf32> -> vector<128x128xf32>
    %26 = arith.addf %23, %25 : vector<128x128xf32>
    %c0_14 = arith.constant 0 : index
    %c0_15 = arith.constant 0 : index
    %27 = vector.load %arg9[%c0_14, %c0_15] : memref<1x128xf32, #tpu.memory_space<vmem>>, vector<1x128xf32>
    %28 = vector.broadcast %27 : vector<1x128xf32> to vector<128x128xf32>
    %29 = arith.addf %26, %28 : vector<128x128xf32>
    %cst_16 = arith.constant 0.000000e+00 : f32
    %30 = vector.broadcast %cst_16 : f32 to vector<128x128xf32>
    %31 = arith.maximumf %29, %30 : vector<128x128xf32>
    %32 = arith.truncf %31 : vector<128x128xf32> to vector<128x128xbf16>
    %c0_17 = arith.constant 0 : index
    %c0_18 = arith.constant 0 : index
    %33 = vector.load %arg3[%c0_17, %c0_18] : memref<128x1xi32, #tpu.memory_space<vmem>>, vector<128x1xi32>
    %c0_19 = arith.constant 0 : index
    %c0_20 = arith.constant 0 : index
    %34 = vector.load %arg4[%c0_19, %c0_20] : memref<1x128xi32, #tpu.memory_space<vmem>>, vector<1x128xi32>
    %c0_21 = arith.constant 0 : index
    %c0_22 = arith.constant 0 : index
    %35 = vector.load %arg5[%c0_21, %c0_22] : memref<16x1xf32, #tpu.memory_space<vmem>>, vector<16x1xf32>
    %36 = tpu.iota {dimensions = array<i32: 1>} : vector<128x128xi32>
    %37 = vector.broadcast %33 : vector<128x1xi32> to vector<128x128xi32>
    %38 = arith.cmpi eq, %37, %36 : vector<128x128xi32>
    %39 = arith.extui %38 : vector<128x128xi1> to vector<128x128xi32>
    %40 = arith.sitofp %39 : vector<128x128xi32> to vector<128x128xf32>
    %41 = arith.truncf %40 : vector<128x128xf32> to vector<128x128xbf16>
    %42 = tpu.iota {dimensions = array<i32: 0>} : vector<16x128xi32>
    %43 = vector.broadcast %34 : vector<1x128xi32> to vector<16x128xi32>
    %44 = arith.cmpi eq, %43, %42 : vector<16x128xi32>
    %45 = arith.extui %44 : vector<16x128xi1> to vector<16x128xi32>
    %46 = arith.sitofp %45 : vector<16x128xi32> to vector<16x128xf32>
    %47 = arith.truncf %46 : vector<16x128xf32> to vector<16x128xbf16>
    %cst_23 = arith.constant dense<0.000000e+00> : vector<128x128xf32>
    %48 = tpu.matmul %41, %32, %cst_23 {dimension_numbers = #tpu.dot_dimension_numbers<[1], [0], [0], [1], [0, 0, 1, 1], [], []>} : vector<128x128xbf16>, vector<128x128xbf16>, vector<128x128xf32> -> vector<128x128xf32>
    %49 = arith.truncf %48 : vector<128x128xf32> to vector<128x128xbf16>
    %cst_24 = arith.constant dense<0.000000e+00> : vector<16x128xf32>
    %50 = tpu.matmul %47, %49, %cst_24 {dimension_numbers = #tpu.dot_dimension_numbers<[1], [0], [0], [1], [0, 0, 1, 1], [], []>} : vector<16x128xbf16>, vector<128x128xbf16>, vector<16x128xf32> -> vector<16x128xf32>
    %51 = vector.broadcast %35 : vector<16x1xf32> to vector<16x128xf32>
    %52 = arith.mulf %50, %51 : vector<16x128xf32>
    %53 = vector.extract_strided_slice %32 {offsets = [0, 0], sizes = [16, 128], strides = [1, 1]} : vector<128x128xbf16> to vector<16x128xbf16>
    %54 = arith.truncf %52 : vector<16x128xf32> to vector<16x128xbf16>
    %c0_25 = arith.constant 0 : index
    %c0_26 = arith.constant 0 : index
    %55 = vector.load %arg10[%c0_25, %c0_26] : memref<128x128xbf16, #tpu.memory_space<vmem>>, vector<128x128xbf16>
    %cst_27 = arith.constant dense<0.000000e+00> : vector<16x128xf32>
    %56 = tpu.matmul %54, %55, %cst_27 {dimension_numbers = #tpu.dot_dimension_numbers<[1], [0], [0], [1], [0, 0, 1, 1], [], []>} : vector<16x128xbf16>, vector<128x128xbf16>, vector<16x128xf32> -> vector<16x128xf32>
    %c0_28 = arith.constant 0 : index
    %c0_29 = arith.constant 0 : index
    %57 = vector.load %arg11[%c0_28, %c0_29] : memref<128x128xbf16, #tpu.memory_space<vmem>>, vector<128x128xbf16>
    %cst_30 = arith.constant dense<0.000000e+00> : vector<16x128xf32>
    %58 = tpu.matmul %53, %57, %cst_30 {dimension_numbers = #tpu.dot_dimension_numbers<[1], [0], [0], [1], [0, 0, 1, 1], [], []>} : vector<16x128xbf16>, vector<128x128xbf16>, vector<16x128xf32> -> vector<16x128xf32>
    %59 = arith.addf %56, %58 : vector<16x128xf32>
    %c0_31 = arith.constant 0 : index
    %c0_32 = arith.constant 0 : index
    %60 = vector.load %arg12[%c0_31, %c0_32] : memref<1x128xf32, #tpu.memory_space<vmem>>, vector<1x128xf32>
    %61 = vector.broadcast %60 : vector<1x128xf32> to vector<16x128xf32>
    %62 = arith.addf %59, %61 : vector<16x128xf32>
    %63 = tpu.iota {dimensions = array<i32: 1>} : vector<16x128xi32>
    %c16_i32 = arith.constant 16 : i32
    %64 = vector.broadcast %c16_i32 : i32 to vector<16x128xi32>
    %65 = arith.cmpi slt, %63, %64 : vector<16x128xi32>
    %cst_33 = arith.constant -1.000000e+30 : f32
    %66 = vector.broadcast %cst_33 : f32 to vector<16x128xf32>
    %67 = arith.select %65, %62, %66 : vector<16x128xi1>, vector<16x128xf32>
    %cst_34 = arith.constant dense<0xFF800000> : vector<16xf32>
    %68 = vector.multi_reduction <maximumf>, %67, %cst_34 [1] : vector<16x128xf32> to vector<16xf32>
    %69 = vector.shape_cast %68 : vector<16xf32> to vector<16x1xf32>
    %70 = vector.broadcast %69 : vector<16x1xf32> to vector<16x128xf32>
    %71 = arith.subf %67, %70 : vector<16x128xf32>
    %72 = math.exp %71 : vector<16x128xf32>
    %cst_35 = arith.constant dense<0.000000e+00> : vector<16xf32>
    %73 = vector.multi_reduction <add>, %72, %cst_35 [1] : vector<16x128xf32> to vector<16xf32>
    %74 = vector.shape_cast %73 : vector<16xf32> to vector<16x1xf32>
    %75 = math.log %74 : vector<16x1xf32>
    %76 = arith.addf %69, %75 : vector<16x1xf32>
    %77 = vector.broadcast %76 : vector<16x1xf32> to vector<16x128xf32>
    %78 = arith.subf %67, %77 : vector<16x128xf32>
    %c0_36 = arith.constant 0 : index
    %c0_37 = arith.constant 0 : index
    %79 = vector.load %arg13[%c0_36, %c0_37] : memref<16x128xf32, #tpu.memory_space<vmem>>, vector<16x128xf32>
    tpu.vector_store %arg13[%c0_36, %c0_37], %78 {strides = array<i32>} : memref<16x128xf32, #tpu.memory_space<vmem>>, vector<16x128xf32>,
    return
  }
}

</mosaic_0001>

<llo_original>
// kernel: tpu_custom_call.1
$region0: #{tpu_custom_call.1}
  #allocation0 [shape = 'u32[]', space=smem, size = 0x4, offset = 0x4, fixed_abs, tag = 'smem constant byte address 0x4 - core index']
  #allocation1 [shape = 'u32[144,128]{1,0:T(1,128)}', space=vmem, size = 0x12000, scoped, tag = 'internal scratch']
  %s0 = inlined_call_operand.vmem [shape: s32[128,1], index: 0, kind: input, shape index: {}]
  %s1 = inlined_call_operand.vmem [shape: s32[1,128], index: 1, kind: input, shape index: {}]
  %s2 = inlined_call_operand.vmem [shape: f32[128,1], index: 2, kind: input, shape index: {}]
  %s3 = inlined_call_operand.vmem [shape: s32[128,1], index: 3, kind: input, shape index: {}]
  %s4 = inlined_call_operand.vmem [shape: s32[1,128], index: 4, kind: input, shape index: {}]
  %s5 = inlined_call_operand.vmem [shape: f32[16,1], index: 5, kind: input, shape index: {}]
  %s6 = inlined_call_operand.vmem [shape: bf16[128,128], index: 6, kind: input, shape index: {}]
  %s7 = inlined_call_operand.vmem [shape: bf16[128,128], index: 7, kind: input, shape index: {}]
  %s8 = inlined_call_operand.vmem [shape: bf16[128,128], index: 8, kind: input, shape index: {}]
  %s9 = inlined_call_operand.vmem [shape: f32[1,128], index: 9, kind: input, shape index: {}]
  %s10 = inlined_call_operand.vmem [shape: bf16[128,128], index: 10, kind: input, shape index: {}]
  %s11 = inlined_call_operand.vmem [shape: bf16[128,128], index: 11, kind: input, shape index: {}]
  %s12 = inlined_call_operand.vmem [shape: f32[1,128], index: 12, kind: input, shape index: {}]
  %s13 = inlined_call_operand.hbm [shape: f32[16,128], index: 13, kind: output, shape index: {}]
  %s14 = sld [smem:[#allocation0]]
  $region62: #{tpu_custom_call.1} parent=0
    _
  %s16 = ssub.s32 1, %s14
  %s17 = scalar_select 0, %s16, %s14
  $region1: #{tpu_custom_call.1} parent=0
    #allocation2 [shape = 'u8[8192]{0}', space=vmem, size = 0x2000, scoped, tag = 'output window, operand 0, single buffered']
    #allocation3 [shape = 's32[1]{0}', space=sflag, size = 0x4, scoped, tag = 'scoped memory for tpu_custom_call.1']
    %18 = vsyncpa [#allocation3], 0
    // Predicated region
    $region2: #{tpu_custom_call.1} parent=1 // pred_check
      _
    $region3: #{tpu_custom_call.1} parent=1 // pred_check_branch
      %20 = sbr.rel (0) target = $region5
    $region4: #{tpu_custom_call.1} parent=1 // pred_region
      _
    $region5: #{tpu_custom_call.1} parent=1 // pred_fallthru
      _
    // Predicated region
    $region6: #{tpu_custom_call.1} parent=1 // pred_check
      _
    $region7: #{tpu_custom_call.1} parent=1 // pred_check_branch
      %22 = sbr.rel (0) target = $region9
    $region8: #{tpu_custom_call.1} parent=1 // pred_region
      _
    $region9: #{tpu_custom_call.1} parent=1 // pred_fallthru
      _
    // Predicated region
    $region10: #{tpu_custom_call.1} parent=1 // pred_check
      _
    $region11: #{tpu_custom_call.1} parent=1 // pred_check_branch
      %24 = sbr.rel (0) target = $region13
    $region12: #{tpu_custom_call.1} parent=1 // pred_region
      _
    $region13: #{tpu_custom_call.1} parent=1 // pred_fallthru
      _
    // Predicated region
    $region14: #{tpu_custom_call.1} parent=1 // pred_check
      _
    $region15: #{tpu_custom_call.1} parent=1 // pred_check_branch
      %26 = sbr.rel (0) target = $region17
    $region16: #{tpu_custom_call.1} parent=1 // pred_region
      _
    $region17: #{tpu_custom_call.1} parent=1 // pred_fallthru
      _
    // Predicated region
    $region18: #{tpu_custom_call.1} parent=1 // pred_check
      _
    $region19: #{tpu_custom_call.1} parent=1 // pred_check_branch
      %28 = sbr.rel (0) target = $region21
    $region20: #{tpu_custom_call.1} parent=1 // pred_region
      _
    $region21: #{tpu_custom_call.1} parent=1 // pred_fallthru
      _
    // Predicated region
    $region22: #{tpu_custom_call.1} parent=1 // pred_check
      _
    $region23: #{tpu_custom_call.1} parent=1 // pred_check_branch
      %30 = sbr.rel (0) target = $region25
    $region24: #{tpu_custom_call.1} parent=1 // pred_region
      _
    $region25: #{tpu_custom_call.1} parent=1 // pred_fallthru
      _
    // Predicated region
    $region26: #{tpu_custom_call.1} parent=1 // pred_check
      _
    $region27: #{tpu_custom_call.1} parent=1 // pred_check_branch
      %32 = sbr.rel (0) target = $region29
    $region28: #{tpu_custom_call.1} parent=1 // pred_region
      _
    $region29: #{tpu_custom_call.1} parent=1 // pred_fallthru
      _
    // Predicated region
    $region30: #{tpu_custom_call.1} parent=1 // pred_check
      _
    $region31: #{tpu_custom_call.1} parent=1 // pred_check_branch
      %34 = sbr.rel (0) target = $region33
    $region32: #{tpu_custom_call.1} parent=1 // pred_region
      _
    $region33: #{tpu_custom_call.1} parent=1 // pred_fallthru
      _
    // Predicated region
    $region34: #{tpu_custom_call.1} parent=1 // pred_check
      _
    $region35: #{tpu_custom_call.1} parent=1 // pred_check_branch
      %36 = sbr.rel (0) target = $region37
    $region36: #{tpu_custom_call.1} parent=1 // pred_region
      _
    $region37: #{tpu_custom_call.1} parent=1 // pred_fallthru
      _
    // Predicated region
    $region38: #{tpu_custom_call.1} parent=1 // pred_check
      _
    $region39: #{tpu_custom_call.1} parent=1 // pred_check_branch
      %38 = sbr.rel (0) target = $region41
    $region40: #{tpu_custom_call.1} parent=1 // pred_region
      _
    $region41: #{tpu_custom_call.1} parent=1 // pred_fallthru
      _
    // Predicated region
    $region42: #{tpu_custom_call.1} parent=1 // pred_check
      _
    $region43: #{tpu_custom_call.1} parent=1 // pred_check_branch
      %40 = sbr.rel (0) target = $region45
    $region44: #{tpu_custom_call.1} parent=1 // pred_region
      _
    $region45: #{tpu_custom_call.1} parent=1 // pred_fallthru
      _
    // Predicated region
    $region46: #{tpu_custom_call.1} parent=1 // pred_check
      _
    $region47: #{tpu_custom_call.1} parent=1 // pred_check_branch
      %42 = sbr.rel (0) target = $region49
    $region48: #{tpu_custom_call.1} parent=1 // pred_region
      _
    $region49: #{tpu_custom_call.1} parent=1 // pred_fallthru
      _
    // Predicated region
    $region50: #{tpu_custom_call.1} parent=1 // pred_check
      _
    $region51: #{tpu_custom_call.1} parent=1 // pred_check_branch
      %44 = sbr.rel (0) target = $region53
    $region52: #{tpu_custom_call.1} parent=1 // pred_region
      _
    $region53: #{tpu_custom_call.1} parent=1 // pred_fallthru
      _
    %v46 = vld [vmem:[%s6] sm:$0xf]
    %v47 = vld [vmem:[%s6 + $0x4] sm:$0xf]
    %v48 = vld [vmem:[%s6 + $0x8] sm:$0xf]
    %v49 = vld [vmem:[%s6 + $0xc] sm:$0xf]
    %v50 = vld [vmem:[%s6 + $0x10] sm:$0xf]
    %v51 = vld [vmem:[%s6 + $0x14] sm:$0xf]
    %v52 = vld [vmem:[%s6 + $0x18] sm:$0xf]
    %v53 = vld [vmem:[%s6 + $0x1c] sm:$0xf]
    %v54 = vld [vmem:[%s6 + $0x20] sm:$0xf]
    %v55 = vld [vmem:[%s6 + $0x24] sm:$0xf]
    %v56 = vld [vmem:[%s6 + $0x28] sm:$0xf]
    %v57 = vld [vmem:[%s6 + $0x2c] sm:$0xf]
    %v58 = vld [vmem:[%s6 + $0x30] sm:$0xf]
    %v59 = vld [vmem:[%s6 + $0x34] sm:$0xf]
    %v60 = vld [vmem:[%s6 + $0x38] sm:$0xf]
    %v61 = vld [vmem:[%s6 + $0x3c] sm:$0xf]
    %v62 = vld [vmem:[%s0] sm:$0xff]
    %v63 = vld [vmem:[%s0 + $0x8] sm:$0xff]
    %v64 = vld [vmem:[%s0 + $0x10] sm:$0xff]
    %v65 = vld [vmem:[%s0 + $0x18] sm:$0xff]
    %v66 = vld [vmem:[%s0 + $0x20] sm:$0xff]
    %v67 = vld [vmem:[%s0 + $0x28] sm:$0xff]
    %v68 = vld [vmem:[%s0 + $0x30] sm:$0xff]
    %v69 = vld [vmem:[%s0 + $0x38] sm:$0xff]
    %v70 = vld [vmem:[%s0 + $0x40] sm:$0xff]
    %v71 = vld [vmem:[%s0 + $0x48] sm:$0xff]
    %v72 = vld [vmem:[%s0 + $0x50] sm:$0xff]
    %v73 = vld [vmem:[%s0 + $0x58] sm:$0xff]
    %v74 = vld [vmem:[%s0 + $0x60] sm:$0xff]
    %v75 = vld [vmem:[%s0 + $0x68] sm:$0xff]
    %v76 = vld [vmem:[%s0 + $0x70] sm:$0xff]
    %v77 = vld [vmem:[%s0 + $0x78] sm:$0xff]
    %v78 = vld [vmem:[%s1] sm:$0x1]
    %v79 = vld [vmem:[%s2] sm:$0xff]
    %v80 = vld [vmem:[%s2 + $0x8] sm:$0xff]
    %v81 = vld [vmem:[%s2 + $0x10] sm:$0xff]
    %v82 = vld [vmem:[%s2 + $0x18] sm:$0xff]
    %v83 = vld [vmem:[%s2 + $0x20] sm:$0xff]
    %v84 = vld [vmem:[%s2 + $0x28] sm:$0xff]
    %v85 = vld [vmem:[%s2 + $0x30] sm:$0xff]
    %v86 = vld [vmem:[%s2 + $0x38] sm:$0xff]
    %v87 = vld [vmem:[%s2 + $0x40] sm:$0xff]
    %v88 = vld [vmem:[%s2 + $0x48] sm:$0xff]
    %v89 = vld [vmem:[%s2 + $0x50] sm:$0xff]
    %v90 = vld [vmem:[%s2 + $0x58] sm:$0xff]
    %v91 = vld [vmem:[%s2 + $0x60] sm:$0xff]
    %v92 = vld [vmem:[%s2 + $0x68] sm:$0xff]
    %v93 = vld [vmem:[%s2 + $0x70] sm:$0xff]
    %v94 = vld [vmem:[%s2 + $0x78] sm:$0xff]
    %v95 = vlaneseq
    %v96 = vand.u32 %v95, 127
    %97 = vset.pattern.permute.xlu0 0
    %98 = vperm.xlu0 %97, %v62
    %v99 = vpop.permute.xlu0 %98
    %100 = vset.pattern.permute.xlu0 0
    %101 = vperm.xlu0 %100, %v63
    %v102 = vpop.permute.xlu0 %101
    %103 = vset.pattern.permute.xlu0 0
    %104 = vperm.xlu0 %103, %v64
    %v105 = vpop.permute.xlu0 %104
    %106 = vset.pattern.permute.xlu0 0
    %107 = vperm.xlu0 %106, %v65
    %v108 = vpop.permute.xlu0 %107
    %109 = vset.pattern.permute.xlu0 0
    %110 = vperm.xlu0 %109, %v66
    %v111 = vpop.permute.xlu0 %110
    %112 = vset.pattern.permute.xlu0 0
    %113 = vperm.xlu0 %112, %v67
    %v114 = vpop.permute.xlu0 %113
    %115 = vset.pattern.permute.xlu0 0
    %116 = vperm.xlu0 %115, %v68
    %v117 = vpop.permute.xlu0 %116
    %118 = vset.pattern.permute.xlu0 0
    %119 = vperm.xlu0 %118, %v69
    %v120 = vpop.permute.xlu0 %119
    %121 = vset.pattern.permute.xlu0 0
    %122 = vperm.xlu0 %121, %v70
    %v123 = vpop.permute.xlu0 %122
    %124 = vset.pattern.permute.xlu0 0
    %125 = vperm.xlu0 %124, %v71
    %v126 = vpop.permute.xlu0 %125
    %127 = vset.pattern.permute.xlu0 0
    %128 = vperm.xlu0 %127, %v72
    %v129 = vpop.permute.xlu0 %128
    %130 = vset.pattern.permute.xlu0 0
    %131 = vperm.xlu0 %130, %v73
    %v132 = vpop.permute.xlu0 %131
    %133 = vset.pattern.permute.xlu0 0
    %134 = vperm.xlu0 %133, %v74
    %v135 = vpop.permute.xlu0 %134
    %136 = vset.pattern.permute.xlu0 0
    %137 = vperm.xlu0 %136, %v75
    %v138 = vpop.permute.xlu0 %137
    %139 = vset.pattern.permute.xlu0 0
    %140 = vperm.xlu0 %139, %v76
    %v141 = vpop.permute.xlu0 %140
    %142 = vset.pattern.permute.xlu0 0
    %143 = vperm.xlu0 %142, %v77
    %v144 = vpop.permute.xlu0 %143
    %vm145 = vcmp.eq.s32.totalorder %v99, %v96
    %vm146 = vcmp.eq.s32.totalorder %v102, %v96
    %vm147 = vcmp.eq.s32.totalorder %v105, %v96
    %vm148 = vcmp.eq.s32.totalorder %v108, %v96
    %vm149 = vcmp.eq.s32.totalorder %v111, %v96
    %vm150 = vcmp.eq.s32.totalorder %v114, %v96
    %vm151 = vcmp.eq.s32.totalorder %v117, %v96
    %vm152 = vcmp.eq.s32.totalorder %v120, %v96
    %vm153 = vcmp.eq.s32.totalorder %v123, %v96
    %vm154 = vcmp.eq.s32.totalorder %v126, %v96
    %vm155 = vcmp.eq.s32.totalorder %v129, %v96
    %vm156 = vcmp.eq.s32.totalorder %v132, %v96
    %vm157 = vcmp.eq.s32.totalorder %v135, %v96
    %vm158 = vcmp.eq.s32.totalorder %v138, %v96
    %vm159 = vcmp.eq.s32.totalorder %v141, %v96
    %vm160 = vcmp.eq.s32.totalorder %v144, %v96
    %v161 = vsel %vm145, 1, 0
    %v162 = vsel %vm146, 1, 0
    %v163 = vsel %vm147, 1, 0
    %v164 = vsel %vm148, 1, 0
    %v165 = vsel %vm149, 1, 0
    %v166 = vsel %vm150, 1, 0
    %v167 = vsel %vm151, 1, 0
    %v168 = vsel %vm152, 1, 0
    %v169 = vsel %vm153, 1, 0
    %v170 = vsel %vm154, 1, 0
    %v171 = vsel %vm155, 1, 0
    %v172 = vsel %vm156, 1, 0
    %v173 = vsel %vm157, 1, 0
    %v174 = vsel %vm158, 1, 0
    %v175 = vsel %vm159, 1, 0
    %v176 = vsel %vm160, 1, 0
    %v177 = vcvt.s32.f32 %v161
    %v178 = vcvt.s32.f32 %v162
    %v179 = vcvt.s32.f32 %v163
    %v180 = vcvt.s32.f32 %v164
    %v181 = vcvt.s32.f32 %v165
    %v182 = vcvt.s32.f32 %v166
    %v183 = vcvt.s32.f32 %v167
    %v184 = vcvt.s32.f32 %v168
    %v185 = vcvt.s32.f32 %v169
    %v186 = vcvt.s32.f32 %v170
    %v187 = vcvt.s32.f32 %v171
    %v188 = vcvt.s32.f32 %v172
    %v189 = vcvt.s32.f32 %v173
    %v190 = vcvt.s32.f32 %v174
    %v191 = vcvt.s32.f32 %v175
    %v192 = vcvt.s32.f32 %v176
    %v193 = vpack.c.bf16 %v178, %v177
    %v194 = vpack.c.bf16 %v180, %v179
    %v195 = vpack.c.bf16 %v182, %v181
    %v196 = vpack.c.bf16 %v184, %v183
    %v197 = vpack.c.bf16 %v186, %v185
    %v198 = vpack.c.bf16 %v188, %v187
    %v199 = vpack.c.bf16 %v190, %v189
    %v200 = vpack.c.bf16 %v192, %v191
    %v201 = vlaneseq
    %v202 = vshrl.u32 %v201, 7
    %v203 = vadd.s32 %v202, 8
    %v204 = vadd.s32 %v202, 16
    %v205 = vadd.s32 %v202, 24
    %v206 = vadd.s32 %v202, 32
    %v207 = vadd.s32 %v202, 40
    %v208 = vadd.s32 %v202, 48
    %v209 = vadd.s32 %v202, 56
    %v210 = vadd.s32 %v202, 64
    %v211 = vadd.s32 %v202, 72
    %v212 = vadd.s32 %v202, 80
    %v213 = vadd.s32 %v202, 88
    %v214 = vadd.s32 %v202, 96
    %v215 = vadd.s32 %v202, 104
    %v216 = vadd.s32 %v202, 112
    %v217 = vadd.s32 %v202, 120
    %v218 = vlaneseq
    %v219 = vshrl.u32 %v218, 7
    %v220 = vsub.s32 0, %v219
    %v221 = vrot.slane %v78, %v220
    %vm222 = vcmp.eq.s32.totalorder %v221, %v202
    %vm223 = vcmp.eq.s32.totalorder %v221, %v203
    %vm224 = vcmp.eq.s32.totalorder %v221, %v204
    %vm225 = vcmp.eq.s32.totalorder %v221, %v205
    %vm226 = vcmp.eq.s32.totalorder %v221, %v206
    %vm227 = vcmp.eq.s32.totalorder %v221, %v207
    %vm228 = vcmp.eq.s32.totalorder %v221, %v208
    %vm229 = vcmp.eq.s32.totalorder %v221, %v209
    %vm230 = vcmp.eq.s32.totalorder %v221, %v210
    %vm231 = vcmp.eq.s32.totalorder %v221, %v211
    %vm232 = vcmp.eq.s32.totalorder %v221, %v212
    %vm233 = vcmp.eq.s32.totalorder %v221, %v213
    %vm234 = vcmp.eq.s32.totalorder %v221, %v214
    %vm235 = vcmp.eq.s32.totalorder %v221, %v215
    %vm236 = vcmp.eq.s32.totalorder %v221, %v216
    %vm237 = vcmp.eq.s32.totalorder %v221, %v217
    %v238 = vsel %vm222, 1, 0
    %v239 = vsel %vm223, 1, 0
    %v240 = vsel %vm224, 1, 0
    %v241 = vsel %vm225, 1, 0
    %v242 = vsel %vm226, 1, 0
    %v243 = vsel %vm227, 1, 0
    %v244 = vsel %vm228, 1, 0
    %v245 = vsel %vm229, 1, 0
    %v246 = vsel %vm230, 1, 0
    %v247 = vsel %vm231, 1, 0
    %v248 = vsel %vm232, 1, 0
    %v249 = vsel %vm233, 1, 0
    %v250 = vsel %vm234, 1, 0
    %v251 = vsel %vm235, 1, 0
    %v252 = vsel %vm236, 1, 0
    %v253 = vsel %vm237, 1, 0
    %v254 = vcvt.s32.f32 %v238
    %v255 = vcvt.s32.f32 %v239
    %v256 = vcvt.s32.f32 %v240
    %v257 = vcvt.s32.f32 %v241
    %v258 = vcvt.s32.f32 %v242
    %v259 = vcvt.s32.f32 %v243
    %v260 = vcvt.s32.f32 %v244
    %v261 = vcvt.s32.f32 %v245
    %v262 = vcvt.s32.f32 %v246
    %v263 = vcvt.s32.f32 %v247
    %v264 = vcvt.s32.f32 %v248
    %v265 = vcvt.s32.f32 %v249
    %v266 = vcvt.s32.f32 %v250
    %v267 = vcvt.s32.f32 %v251
    %v268 = vcvt.s32.f32 %v252
    %v269 = vcvt.s32.f32 %v253
    %v270 = vpack.c.bf16 %v255, %v254
    %v271 = vpack.c.bf16 %v257, %v256
    %v272 = vpack.c.bf16 %v259, %v258
    %v273 = vpack.c.bf16 %v261, %v260
    %v274 = vpack.c.bf16 %v263, %v262
    %v275 = vpack.c.bf16 %v265, %v264
    %v276 = vpack.c.bf16 %v267, %v266
    %v277 = vpack.c.bf16 %v269, %v268
    %v294 = vunpack.c.l.b16 %v46
    %v295 = vunpack.c.l.b16 %v47
    %v296 = vunpack.c.l.b16 %v48
    %v297 = vunpack.c.l.b16 %v49
    %v298 = vunpack.c.l.b16 %v50
    %v299 = vunpack.c.l.b16 %v51
    %v300 = vunpack.c.l.b16 %v52
    %v301 = vunpack.c.l.b16 %v53
    %v302 = vunpack.c.l.b16 %v54
    %v303 = vunpack.c.l.b16 %v55
    %v304 = vunpack.c.l.b16 %v56
    %v305 = vunpack.c.l.b16 %v57
    %v306 = vunpack.c.l.b16 %v58
    %v307 = vunpack.c.l.b16 %v59
    %v308 = vunpack.c.l.b16 %v60
    %v309 = vunpack.c.l.b16 %v61
    %v310 = vpack.c.b16 %v295, %v294
    %v311 = vpack.c.b16 %v297, %v296
    %v312 = vpack.c.b16 %v299, %v298
    %v313 = vpack.c.b16 %v301, %v300
    %v314 = vpack.c.b16 %v303, %v302
    %v315 = vpack.c.b16 %v305, %v304
    %v316 = vpack.c.b16 %v307, %v306
    %v317 = vpack.c.b16 %v309, %v308
    %326 = vmatprep.subr.bf16.mxu0 0
    %327 = vmatpush1.bf16.msra.mxu0 %v310
    %328 = vmatprep.subr.bf16.mxu0 0
    %329 = vmatpush1.bf16.msra.mxu0 %v311
    %330 = vmatprep.subr.bf16.mxu0 0
    %331 = vmatpush1.bf16.msra.mxu0 %v312
    %332 = vmatprep.subr.bf16.mxu0 0
    %333 = vmatpush1.bf16.msra.mxu0 %v313
    %334 = vmatprep.subr.bf16.mxu0 0
    %335 = vmatpush1.bf16.msra.mxu0 %v314
    %336 = vmatprep.subr.bf16.mxu0 0
    %337 = vmatpush1.bf16.msra.mxu0 %v315
    %338 = vmatprep.subr.bf16.mxu0 0
    %339 = vmatpush1.bf16.msra.mxu0 %v316
    %340 = vmatprep.subr.bf16.mxu0 0
    %341 = vmatpush1.bf16.msra.mxu0 %v317
    %342 = vmatprep.subr.bf16.mxu0 0
    %343 = vmatpush1.bf16.msra.mxu0 0
    %344 = vmatprep.subr.bf16.mxu0 0
    %345 = vmatpush1.bf16.msra.mxu0 0
    %346 = vmatprep.subr.bf16.mxu0 0
    %347 = vmatpush1.bf16.msra.mxu0 0
    %348 = vmatprep.subr.bf16.mxu0 0
    %349 = vmatpush1.bf16.msra.mxu0 0
    %350 = vmatprep.subr.bf16.mxu0 0
    %351 = vmatpush1.bf16.msra.mxu0 0
    %352 = vmatprep.subr.bf16.mxu0 0
    %353 = vmatpush1.bf16.msra.mxu0 0
    %354 = vmatprep.subr.bf16.mxu0 0
    %355 = vmatpush1.bf16.msra.mxu0 0
    %356 = vmatprep.subr.bf16.mxu0 0
    %357 = vmatpush1.bf16.msra.mxu0 0
    %358 = vmatprep.mubr.bf16.mxu0 0
    %359 = vmatmul.mubr.bf16.gmra.mrb[0].mxu0 %v193
    %v360 = vpop.f32.mrb[0].mxu0
    %v361 = vadd.f32 0.0, %v360
    %v362 = vpop.f32.mrb[0].mxu0
    %v363 = vpop.f32.mrb[0].mxu0
    %v364 = vadd.f32 0.0, %v363
    %v365 = vpop.f32.mrb[0].mxu0
    %366 = vmatprep.mubr.bf16.mxu0 0
    %367 = vmatmul.mubr.bf16.gmra.mrb[0].mxu0 %v194
    %v368 = vpop.f32.mrb[0].mxu0
    %v369 = vadd.f32 0.0, %v368
    %v370 = vpop.f32.mrb[0].mxu0
    %v371 = vpop.f32.mrb[0].mxu0
    %v372 = vadd.f32 0.0, %v371
    %v373 = vpop.f32.mrb[0].mxu0
    %374 = vmatprep.mubr.bf16.mxu0 0
    %375 = vmatmul.mubr.bf16.gmra.mrb[0].mxu0 %v195
    %v376 = vpop.f32.mrb[0].mxu0
    %v377 = vadd.f32 0.0, %v376
    %v378 = vpop.f32.mrb[0].mxu0
    %v379 = vpop.f32.mrb[0].mxu0
    %v380 = vadd.f32 0.0, %v379
    %v381 = vpop.f32.mrb[0].mxu0
    %382 = vmatprep.mubr.bf16.mxu0 0
    %383 = vmatmul.mubr.bf16.gmra.mrb[0].mxu0 %v196
    %v384 = vpop.f32.mrb[0].mxu0
    %v385 = vadd.f32 0.0, %v384
    %v386 = vpop.f32.mrb[0].mxu0
    %v387 = vpop.f32.mrb[0].mxu0
    %v388 = vadd.f32 0.0, %v387
    %v389 = vpop.f32.mrb[0].mxu0
    %390 = vmatprep.mubr.bf16.mxu0 0
    %391 = vmatmul.mubr.bf16.gmra.mrb[0].mxu0 %v197
    %v392 = vpop.f32.mrb[0].mxu0
    %v393 = vadd.f32 0.0, %v392
    %v394 = vpop.f32.mrb[0].mxu0
    %v395 = vpop.f32.mrb[0].mxu0
    %v396 = vadd.f32 0.0, %v395
    %v397 = vpop.f32.mrb[0].mxu0
    %398 = vmatprep.mubr.bf16.mxu0 0
    %399 = vmatmul.mubr.bf16.gmra.mrb[0].mxu0 %v198
    %v400 = vpop.f32.mrb[0].mxu0
    %v401 = vadd.f32 0.0, %v400
    %v402 = vpop.f32.mrb[0].mxu0
    %v403 = vpop.f32.mrb[0].mxu0
    %v404 = vadd.f32 0.0, %v403
    %v405 = vpop.f32.mrb[0].mxu0
    %406 = vmatprep.mubr.bf16.mxu0 0
    %407 = vmatmul.mubr.bf16.gmra.mrb[0].mxu0 %v199
    %v408 = vpop.f32.mrb[0].mxu0
    %v409 = vadd.f32 0.0, %v408
    %v410 = vpop.f32.mrb[0].mxu0
    %v411 = vpop.f32.mrb[0].mxu0
    %v412 = vadd.f32 0.0, %v411
    %v413 = vpop.f32.mrb[0].mxu0
    %414 = vmatprep.mubr.bf16.mxu0 0
    %415 = vmatmul.mubr.bf16.gmra.mrb[0].mxu0 %v200
    %v416 = vpop.f32.mrb[0].mxu0
    %v417 = vadd.f32 0.0, %v416
    %v418 = vpop.f32.mrb[0].mxu0
    %v419 = vpop.f32.mrb[0].mxu0
    %v420 = vadd.f32 0.0, %v419
    %v421 = vpop.f32.mrb[0].mxu0
    %422 = vdwg.mxu0
    %v423 = vpack.c.bf16 %v364, %v361
    %v424 = vpack.c.bf16 %v372, %v369
    %v425 = vpack.c.bf16 %v380, %v377
    %v426 = vpack.c.bf16 %v388, %v385
    %v427 = vpack.c.bf16 %v396, %v393
    %v428 = vpack.c.bf16 %v404, %v401
    %v429 = vpack.c.bf16 %v412, %v409
    %v430 = vpack.c.bf16 %v420, %v417
    %431 = vmatprep.subr.bf16.mxu0 0
    %432 = vmatpush1.bf16.msra.mxu0 %v423
    %433 = vmatprep.subr.bf16.mxu0 0
    %434 = vmatpush1.bf16.msra.mxu0 %v424
    %435 = vmatprep.subr.bf16.mxu0 0
    %436 = vmatpush1.bf16.msra.mxu0 %v425
    %437 = vmatprep.subr.bf16.mxu0 0
    %438 = vmatpush1.bf16.msra.mxu0 %v426
    %439 = vmatprep.subr.bf16.mxu0 0
    %440 = vmatpush1.bf16.msra.mxu0 %v427
    %441 = vmatprep.subr.bf16.mxu0 0
    %442 = vmatpush1.bf16.msra.mxu0 %v428
    %443 = vmatprep.subr.bf16.mxu0 0
    %444 = vmatpush1.bf16.msra.mxu0 %v429
    %445 = vmatprep.subr.bf16.mxu0 0
    %446 = vmatpush1.bf16.msra.mxu0 %v430
    %447 = vmatprep.subr.bf16.mxu0 0
    %448 = vmatpush1.bf16.msra.mxu0 0
    %449 = vmatprep.subr.bf16.mxu0 0
    %450 = vmatpush1.bf16.msra.mxu0 0
    %451 = vmatprep.subr.bf16.mxu0 0
    %452 = vmatpush1.bf16.msra.mxu0 0
    %453 = vmatprep.subr.bf16.mxu0 0
    %454 = vmatpush1.bf16.msra.mxu0 0
    %455 = vmatprep.subr.bf16.mxu0 0
    %456 = vmatpush1.bf16.msra.mxu0 0
    %457 = vmatprep.subr.bf16.mxu0 0
    %458 = vmatpush1.bf16.msra.mxu0 0
    %459 = vmatprep.subr.bf16.mxu0 0
    %460 = vmatpush1.bf16.msra.mxu0 0
    %461 = vmatprep.subr.bf16.mxu0 0
    %462 = vmatpush1.bf16.msra.mxu0 0
    %463 = vmatprep.mubr.bf16.mxu0 0
    %464 = vmatmul.mubr.bf16.gmra.mrb[0].mxu0 %v270
    %v465 = vpop.f32.mrb[0].mxu0
    %v466 = vadd.f32 0.0, %v465
    %v467 = vpop.f32.mrb[0].mxu0
    %v468 = vpop.f32.mrb[0].mxu0
    %v469 = vadd.f32 0.0, %v468
    %v470 = vpop.f32.mrb[0].mxu0
    %471 = vmatprep.mubr.bf16.mxu0 0
    %472 = vmatmul.mubr.bf16.gmra.mrb[0].mxu0 %v271
    %v473 = vpop.f32.mrb[0].mxu0
    %v474 = vadd.f32 0.0, %v473
    %v475 = vpop.f32.mrb[0].mxu0
    %v476 = vpop.f32.mrb[0].mxu0
    %v477 = vadd.f32 0.0, %v476
    %v478 = vpop.f32.mrb[0].mxu0
    %479 = vmatprep.mubr.bf16.mxu0 0
    %480 = vmatmul.mubr.bf16.gmra.mrb[0].mxu0 %v272
    %v481 = vpop.f32.mrb[0].mxu0
    %v482 = vadd.f32 0.0, %v481
    %v483 = vpop.f32.mrb[0].mxu0
    %v484 = vpop.f32.mrb[0].mxu0
    %v485 = vadd.f32 0.0, %v484
    %v486 = vpop.f32.mrb[0].mxu0
    %487 = vmatprep.mubr.bf16.mxu0 0
    %488 = vmatmul.mubr.bf16.gmra.mrb[0].mxu0 %v273
    %v489 = vpop.f32.mrb[0].mxu0
    %v490 = vadd.f32 0.0, %v489
    %v491 = vpop.f32.mrb[0].mxu0
    %v492 = vpop.f32.mrb[0].mxu0
    %v493 = vadd.f32 0.0, %v492
    %v494 = vpop.f32.mrb[0].mxu0
    %495 = vmatprep.mubr.bf16.mxu0 0
    %496 = vmatmul.mubr.bf16.gmra.mrb[0].mxu0 %v274
    %v497 = vpop.f32.mrb[0].mxu0
    %v498 = vadd.f32 0.0, %v497
    %v499 = vpop.f32.mrb[0].mxu0
    %v500 = vpop.f32.mrb[0].mxu0
    %v501 = vadd.f32 0.0, %v500
    %v502 = vpop.f32.mrb[0].mxu0
    %503 = vmatprep.mubr.bf16.mxu0 0
    %504 = vmatmul.mubr.bf16.gmra.mrb[0].mxu0 %v275
    %v505 = vpop.f32.mrb[0].mxu0
    %v506 = vadd.f32 0.0, %v505
    %v507 = vpop.f32.mrb[0].mxu0
    %v508 = vpop.f32.mrb[0].mxu0
    %v509 = vadd.f32 0.0, %v508
    %v510 = vpop.f32.mrb[0].mxu0
    %511 = vmatprep.mubr.bf16.mxu0 0
    %512 = vmatmul.mubr.bf16.gmra.mrb[0].mxu0 %v276
    %v513 = vpop.f32.mrb[0].mxu0
    %v514 = vadd.f32 0.0, %v513
    %v515 = vpop.f32.mrb[0].mxu0
    %v516 = vpop.f32.mrb[0].mxu0
    %v517 = vadd.f32 0.0, %v516
    %v518 = vpop.f32.mrb[0].mxu0
    %519 = vmatprep.mubr.bf16.mxu0 0
    %520 = vmatmul.mubr.bf16.gmra.mrb[0].mxu0 %v277
    %v521 = vpop.f32.mrb[0].mxu0
    %v522 = vadd.f32 0.0, %v521
    %v523 = vpop.f32.mrb[0].mxu0
    %v524 = vpop.f32.mrb[0].mxu0
    %v525 = vadd.f32 0.0, %v524
    %v526 = vpop.f32.mrb[0].mxu0
    %527 = vdwg.mxu0
    %529 = vset.pattern.permute.xlu0 0
    %530 = vperm.xlu0 %529, %v79
    %v531 = vpop.permute.xlu0 %530
    %534 = vset.pattern.permute.xlu0 0
    %535 = vperm.xlu0 %534, %v80
    %v536 = vpop.permute.xlu0 %535
    %539 = vset.pattern.permute.xlu0 0
    %540 = vperm.xlu0 %539, %v81
    %v541 = vpop.permute.xlu0 %540
    %544 = vset.pattern.permute.xlu0 0
    %545 = vperm.xlu0 %544, %v82
    %v546 = vpop.permute.xlu0 %545
    %549 = vset.pattern.permute.xlu0 0
    %550 = vperm.xlu0 %549, %v83
    %v551 = vpop.permute.xlu0 %550
    %554 = vset.pattern.permute.xlu0 0
    %555 = vperm.xlu0 %554, %v84
    %v556 = vpop.permute.xlu0 %555
    %559 = vset.pattern.permute.xlu0 0
    %560 = vperm.xlu0 %559, %v85
    %v561 = vpop.permute.xlu0 %560
    %564 = vset.pattern.permute.xlu0 0
    %565 = vperm.xlu0 %564, %v86
    %v566 = vpop.permute.xlu0 %565
    %569 = vset.pattern.permute.xlu0 0
    %570 = vperm.xlu0 %569, %v87
    %v571 = vpop.permute.xlu0 %570
    %574 = vset.pattern.permute.xlu0 0
    %575 = vperm.xlu0 %574, %v88
    %v576 = vpop.permute.xlu0 %575
    %579 = vset.pattern.permute.xlu0 0
    %580 = vperm.xlu0 %579, %v89
    %v581 = vpop.permute.xlu0 %580
    %584 = vset.pattern.permute.xlu0 0
    %585 = vperm.xlu0 %584, %v90
    %v586 = vpop.permute.xlu0 %585
    %589 = vset.pattern.permute.xlu0 0
    %590 = vperm.xlu0 %589, %v91
    %v591 = vpop.permute.xlu0 %590
    %594 = vset.pattern.permute.xlu0 0
    %595 = vperm.xlu0 %594, %v92
    %v596 = vpop.permute.xlu0 %595
    %599 = vset.pattern.permute.xlu0 0
    %600 = vperm.xlu0 %599, %v93
    %v601 = vpop.permute.xlu0 %600
    %604 = vset.pattern.permute.xlu0 0
    %605 = vperm.xlu0 %604, %v94
    %v606 = vpop.permute.xlu0 %605
    %v608 = vmul.f32 %v466, %v531
    %v609 = vmul.f32 %v469, %v536
    %v610 = vmul.f32 %v474, %v541
    %v611 = vmul.f32 %v477, %v546
    %v612 = vmul.f32 %v482, %v551
    %v613 = vmul.f32 %v485, %v556
    %v614 = vmul.f32 %v490, %v561
    %v615 = vmul.f32 %v493, %v566
    %v616 = vmul.f32 %v498, %v571
    %v617 = vmul.f32 %v501, %v576
    %v618 = vmul.f32 %v506, %v581
    %v619 = vmul.f32 %v509, %v586
    %v620 = vmul.f32 %v514, %v591
    %v621 = vmul.f32 %v517, %v596
    %v622 = vmul.f32 %v522, %v601
    %v623 = vmul.f32 %v525, %v606
    %v624 = vpack.c.bf16 %v609, %v608
    %v625 = vpack.c.bf16 %v611, %v610
    %v626 = vpack.c.bf16 %v613, %v612
    %v627 = vpack.c.bf16 %v615, %v614
    %v628 = vpack.c.bf16 %v617, %v616
    %v629 = vpack.c.bf16 %v619, %v618
    %v630 = vpack.c.bf16 %v621, %v620
    %v631 = vpack.c.bf16 %v623, %v622
    %v632 = vld [vmem:[%s7] sm:$0xf]
    %v633 = vld [vmem:[%s7 + $0x4] sm:$0xf]
    %v634 = vld [vmem:[%s7 + $0x8] sm:$0xf]
    %v635 = vld [vmem:[%s7 + $0xc] sm:$0xf]
    %v636 = vld [vmem:[%s7 + $0x10] sm:$0xf]
    %v637 = vld [vmem:[%s7 + $0x14] sm:$0xf]
    %v638 = vld [vmem:[%s7 + $0x18] sm:$0xf]
    %v639 = vld [vmem:[%s7 + $0x1c] sm:$0xf]
    %v640 = vld [vmem:[%s7 + $0x20] sm:$0xf]
    %v641 = vld [vmem:[%s7 + $0x24] sm:$0xf]
    %v642 = vld [vmem:[%s7 + $0x28] sm:$0xf]
    %v643 = vld [vmem:[%s7 + $0x2c] sm:$0xf]
    %v644 = vld [vmem:[%s7 + $0x30] sm:$0xf]
    %v645 = vld [vmem:[%s7 + $0x34] sm:$0xf]
    %v646 = vld [vmem:[%s7 + $0x38] sm:$0xf]
    %v647 = vld [vmem:[%s7 + $0x3c] sm:$0xf]
    %v648 = vld [vmem:[%s8] sm:$0xf]
    %v649 = vld [vmem:[%s8 + $0x4] sm:$0xf]
    %v650 = vld [vmem:[%s8 + $0x8] sm:$0xf]
    %v651 = vld [vmem:[%s8 + $0xc] sm:$0xf]
    %v652 = vld [vmem:[%s8 + $0x10] sm:$0xf]
    %v653 = vld [vmem:[%s8 + $0x14] sm:$0xf]
    %v654 = vld [vmem:[%s8 + $0x18] sm:$0xf]
    %v655 = vld [vmem:[%s8 + $0x1c] sm:$0xf]
    %v656 = vld [vmem:[%s8 + $0x20] sm:$0xf]
    %v657 = vld [vmem:[%s8 + $0x24] sm:$0xf]
    %v658 = vld [vmem:[%s8 + $0x28] sm:$0xf]
    %v659 = vld [vmem:[%s8 + $0x2c] sm:$0xf]
    %v660 = vld [vmem:[%s8 + $0x30] sm:$0xf]
    %v661 = vld [vmem:[%s8 + $0x34] sm:$0xf]
    %v662 = vld [vmem:[%s8 + $0x38] sm:$0xf]
    %v663 = vld [vmem:[%s8 + $0x3c] sm:$0xf]
    %v680 = vunpack.c.l.b16 %v648
    %v681 = vunpack.c.l.b16 %v649
    %v682 = vunpack.c.l.b16 %v650
    %v683 = vunpack.c.l.b16 %v651
    %v684 = vunpack.c.l.b16 %v652
    %v685 = vunpack.c.l.b16 %v653
    %v686 = vunpack.c.l.b16 %v654
    %v687 = vunpack.c.l.b16 %v655
    %v688 = vunpack.c.l.b16 %v656
    %v689 = vunpack.c.l.b16 %v657
    %v690 = vunpack.c.l.b16 %v658
    %v691 = vunpack.c.l.b16 %v659
    %v692 = vunpack.c.l.b16 %v660
    %v693 = vunpack.c.l.b16 %v661
    %v694 = vunpack.c.l.b16 %v662
    %v695 = vunpack.c.l.b16 %v663
    %v696 = vpack.c.b16 %v681, %v680
    %v697 = vpack.c.b16 %v683, %v682
    %v698 = vpack.c.b16 %v685, %v684
    %v699 = vpack.c.b16 %v687, %v686
    %v700 = vpack.c.b16 %v689, %v688
    %v701 = vpack.c.b16 %v691, %v690
    %v702 = vpack.c.b16 %v693, %v692
    %v703 = vpack.c.b16 %v695, %v694
    %712 = vmatprep.subr.bf16.mxu0 0
    %713 = vmatpush1.bf16.msra.mxu0 %v696
    %714 = vmatprep.subr.bf16.mxu0 0
    %715 = vmatpush1.bf16.msra.mxu0 %v697
    %716 = vmatprep.subr.bf16.mxu0 0
    %717 = vmatpush1.bf16.msra.mxu0 %v698
    %718 = vmatprep.subr.bf16.mxu0 0
    %719 = vmatpush1.bf16.msra.mxu0 %v699
    %720 = vmatprep.subr.bf16.mxu0 0
    %721 = vmatpush1.bf16.msra.mxu0 %v700
    %722 = vmatprep.subr.bf16.mxu0 0
    %723 = vmatpush1.bf16.msra.mxu0 %v701
    %724 = vmatprep.subr.bf16.mxu0 0
    %725 = vmatpush1.bf16.msra.mxu0 %v702
    %726 = vmatprep.subr.bf16.mxu0 0
    %727 = vmatpush1.bf16.msra.mxu0 %v703
    %728 = vmatprep.subr.bf16.mxu0 0
    %729 = vmatpush1.bf16.msra.mxu0 0
    %730 = vmatprep.subr.bf16.mxu0 0
    %731 = vmatpush1.bf16.msra.mxu0 0
    %732 = vmatprep.subr.bf16.mxu0 0
    %733 = vmatpush1.bf16.msra.mxu0 0
    %734 = vmatprep.subr.bf16.mxu0 0
    %735 = vmatpush1.bf16.msra.mxu0 0
    %736 = vmatprep.subr.bf16.mxu0 0
    %737 = vmatpush1.bf16.msra.mxu0 0
    %738 = vmatprep.subr.bf16.mxu0 0
    %739 = vmatpush1.bf16.msra.mxu0 0
    %740 = vmatprep.subr.bf16.mxu0 0
    %741 = vmatpush1.bf16.msra.mxu0 0
    %742 = vmatprep.subr.bf16.mxu0 0
    %743 = vmatpush1.bf16.msra.mxu0 0
    %744 = vmatprep.mubr.bf16.mxu0 0
    %745 = vmatmul.mubr.bf16.gmra.mrb[0].mxu0 %v310
    %v746 = vpop.f32.mrb[0].mxu0
    %v747 = vadd.f32 0.0, %v746
    %v748 = vpop.f32.mrb[0].mxu0
    %v749 = vpop.f32.mrb[0].mxu0
    %v750 = vadd.f32 0.0, %v749
    %v751 = vpop.f32.mrb[0].mxu0
    %752 = vmatprep.mubr.bf16.mxu0 0
    %753 = vmatmul.mubr.bf16.gmra.mrb[0].mxu0 %v311
    %v754 = vpop.f32.mrb[0].mxu0
    %v755 = vadd.f32 0.0, %v754
    %v756 = vpop.f32.mrb[0].mxu0
    %v757 = vpop.f32.mrb[0].mxu0
    %v758 = vadd.f32 0.0, %v757
    %v759 = vpop.f32.mrb[0].mxu0
    %760 = vmatprep.mubr.bf16.mxu0 0
    %761 = vmatmul.mubr.bf16.gmra.mrb[0].mxu0 %v312
    %v762 = vpop.f32.mrb[0].mxu0
    %v763 = vadd.f32 0.0, %v762
    %v764 = vpop.f32.mrb[0].mxu0
    %v765 = vpop.f32.mrb[0].mxu0
    %v766 = vadd.f32 0.0, %v765
    %v767 = vpop.f32.mrb[0].mxu0
    %768 = vmatprep.mubr.bf16.mxu0 0
    %769 = vmatmul.mubr.bf16.gmra.mrb[0].mxu0 %v313
    %v770 = vpop.f32.mrb[0].mxu0
    %v771 = vadd.f32 0.0, %v770
    %v772 = vpop.f32.mrb[0].mxu0
    %v773 = vpop.f32.mrb[0].mxu0
    %v774 = vadd.f32 0.0, %v773
    %v775 = vpop.f32.mrb[0].mxu0
    %776 = vmatprep.mubr.bf16.mxu0 0
    %777 = vmatmul.mubr.bf16.gmra.mrb[0].mxu0 %v314
    %v778 = vpop.f32.mrb[0].mxu0
    %v779 = vadd.f32 0.0, %v778
    %v780 = vpop.f32.mrb[0].mxu0
    %v781 = vpop.f32.mrb[0].mxu0
    %v782 = vadd.f32 0.0, %v781
    %v783 = vpop.f32.mrb[0].mxu0
    %784 = vmatprep.mubr.bf16.mxu0 0
    %785 = vmatmul.mubr.bf16.gmra.mrb[0].mxu0 %v315
    %v786 = vpop.f32.mrb[0].mxu0
    %v787 = vadd.f32 0.0, %v786
    %v788 = vpop.f32.mrb[0].mxu0
    %v789 = vpop.f32.mrb[0].mxu0
    %v790 = vadd.f32 0.0, %v789
    %v791 = vpop.f32.mrb[0].mxu0
    %792 = vmatprep.mubr.bf16.mxu0 0
    %793 = vmatmul.mubr.bf16.gmra.mrb[0].mxu0 %v316
    %v794 = vpop.f32.mrb[0].mxu0
    %v795 = vadd.f32 0.0, %v794
    %v796 = vpop.f32.mrb[0].mxu0
    %v797 = vpop.f32.mrb[0].mxu0
    %v798 = vadd.f32 0.0, %v797
    %v799 = vpop.f32.mrb[0].mxu0
    %800 = vmatprep.mubr.bf16.mxu0 0
    %801 = vmatmul.mubr.bf16.gmra.mrb[0].mxu0 %v317
    %v802 = vpop.f32.mrb[0].mxu0
    %v803 = vadd.f32 0.0, %v802
    %v804 = vpop.f32.mrb[0].mxu0
    %v805 = vpop.f32.mrb[0].mxu0
    %v806 = vadd.f32 0.0, %v805
    %v807 = vpop.f32.mrb[0].mxu0
    %808 = vdwg.mxu0
    %v825 = vunpack.c.l.b16 %v632
    %v826 = vunpack.c.l.b16 %v633
    %v827 = vunpack.c.l.b16 %v634
    %v828 = vunpack.c.l.b16 %v635
    %v829 = vunpack.c.l.b16 %v636
    %v830 = vunpack.c.l.b16 %v637
    %v831 = vunpack.c.l.b16 %v638
    %v832 = vunpack.c.l.b16 %v639
    %v833 = vunpack.c.l.b16 %v640
    %v834 = vunpack.c.l.b16 %v641
    %v835 = vunpack.c.l.b16 %v642
    %v836 = vunpack.c.l.b16 %v643
    %v837 = vunpack.c.l.b16 %v644
    %v838 = vunpack.c.l.b16 %v645
    %v839 = vunpack.c.l.b16 %v646
    %v840 = vunpack.c.l.b16 %v647
    %v841 = vpack.c.b16 %v826, %v825
    %v842 = vpack.c.b16 %v828, %v827
    %v843 = vpack.c.b16 %v830, %v829
    %v844 = vpack.c.b16 %v832, %v831
    %v845 = vpack.c.b16 %v834, %v833
    %v846 = vpack.c.b16 %v836, %v835
    %v847 = vpack.c.b16 %v838, %v837
    %v848 = vpack.c.b16 %v840, %v839
    %857 = vmatprep.subr.bf16.mxu0 0
    %858 = vmatpush1.bf16.msra.mxu0 %v841
    %859 = vmatprep.subr.bf16.mxu0 0
    %860 = vmatpush1.bf16.msra.mxu0 %v842
    %861 = vmatprep.subr.bf16.mxu0 0
    %862 = vmatpush1.bf16.msra.mxu0 %v843
    %863 = vmatprep.subr.bf16.mxu0 0
    %864 = vmatpush1.bf16.msra.mxu0 %v844
    %865 = vmatprep.subr.bf16.mxu0 0
    %866 = vmatpush1.bf16.msra.mxu0 %v845
    %867 = vmatprep.subr.bf16.mxu0 0
    %868 = vmatpush1.bf16.msra.mxu0 %v846
    %869 = vmatprep.subr.bf16.mxu0 0
    %870 = vmatpush1.bf16.msra.mxu0 %v847
    %871 = vmatprep.subr.bf16.mxu0 0
    %872 = vmatpush1.bf16.msra.mxu0 %v848
    %873 = vmatprep.subr.bf16.mxu0 0
    %874 = vmatpush1.bf16.msra.mxu0 0
    %875 = vmatprep.subr.bf16.mxu0 0
    %876 = vmatpush1.bf16.msra.mxu0 0
    %877 = vmatprep.subr.bf16.mxu0 0
    %878 = vmatpush1.bf16.msra.mxu0 0
    %879 = vmatprep.subr.bf16.mxu0 0
    %880 = vmatpush1.bf16.msra.mxu0 0
    %881 = vmatprep.subr.bf16.mxu0 0
    %882 = vmatpush1.bf16.msra.mxu0 0
    %883 = vmatprep.subr.bf16.mxu0 0
    %884 = vmatpush1.bf16.msra.mxu0 0
    %885 = vmatprep.subr.bf16.mxu0 0
    %886 = vmatpush1.bf16.msra.mxu0 0
    %887 = vmatprep.subr.bf16.mxu0 0
    %888 = vmatpush1.bf16.msra.mxu0 0
    %889 = vmatprep.mubr.bf16.mxu0 0
    %890 = vmatmul.mubr.bf16.gmra.mrb[0].mxu0 %v624
    %v891 = vpop.f32.mrb[0].mxu0
    %v892 = vadd.f32 %v747, %v891
    %v893 = vpop.f32.mrb[0].mxu0
    %v894 = vpop.f32.mrb[0].mxu0
    %v895 = vadd.f32 %v750, %v894
    %v896 = vpop.f32.mrb[0].mxu0
    %897 = vmatprep.mubr.bf16.mxu0 0
    %898 = vmatmul.mubr.bf16.gmra.mrb[0].mxu0 %v625
    %v899 = vpop.f32.mrb[0].mxu0
    %v900 = vadd.f32 %v755, %v899
    %v901 = vpop.f32.mrb[0].mxu0
    %v902 = vpop.f32.mrb[0].mxu0
    %v903 = vadd.f32 %v758, %v902
    %v904 = vpop.f32.mrb[0].mxu0
    %905 = vmatprep.mubr.bf16.mxu0 0
    %906 = vmatmul.mubr.bf16.gmra.mrb[0].mxu0 %v626
    %v907 = vpop.f32.mrb[0].mxu0
    %v908 = vadd.f32 %v763, %v907
    %v909 = vpop.f32.mrb[0].mxu0
    %v910 = vpop.f32.mrb[0].mxu0
    %v911 = vadd.f32 %v766, %v910
    %v912 = vpop.f32.mrb[0].mxu0
    %913 = vmatprep.mubr.bf16.mxu0 0
    %914 = vmatmul.mubr.bf16.gmra.mrb[0].mxu0 %v627
    %v915 = vpop.f32.mrb[0].mxu0
    %v916 = vadd.f32 %v771, %v915
    %v917 = vpop.f32.mrb[0].mxu0
    %v918 = vpop.f32.mrb[0].mxu0
    %v919 = vadd.f32 %v774, %v918
    %v920 = vpop.f32.mrb[0].mxu0
    %921 = vmatprep.mubr.bf16.mxu0 0
    %922 = vmatmul.mubr.bf16.gmra.mrb[0].mxu0 %v628
    %v923 = vpop.f32.mrb[0].mxu0
    %v924 = vadd.f32 %v779, %v923
    %v925 = vpop.f32.mrb[0].mxu0
    %v926 = vpop.f32.mrb[0].mxu0
    %v927 = vadd.f32 %v782, %v926
    %v928 = vpop.f32.mrb[0].mxu0
    %929 = vmatprep.mubr.bf16.mxu0 0
    %930 = vmatmul.mubr.bf16.gmra.mrb[0].mxu0 %v629
    %v931 = vpop.f32.mrb[0].mxu0
    %v932 = vadd.f32 %v787, %v931
    %v933 = vpop.f32.mrb[0].mxu0
    %v934 = vpop.f32.mrb[0].mxu0
    %v935 = vadd.f32 %v790, %v934
    %v936 = vpop.f32.mrb[0].mxu0
    %937 = vmatprep.mubr.bf16.mxu0 0
    %938 = vmatmul.mubr.bf16.gmra.mrb[0].mxu0 %v630
    %v939 = vpop.f32.mrb[0].mxu0
    %v940 = vadd.f32 %v795, %v939
    %v941 = vpop.f32.mrb[0].mxu0
    %v942 = vpop.f32.mrb[0].mxu0
    %v943 = vadd.f32 %v798, %v942
    %v944 = vpop.f32.mrb[0].mxu0
    %945 = vmatprep.mubr.bf16.mxu0 0
    %946 = vmatmul.mubr.bf16.gmra.mrb[0].mxu0 %v631
    %v947 = vpop.f32.mrb[0].mxu0
    %v948 = vadd.f32 %v803, %v947
    %v949 = vpop.f32.mrb[0].mxu0
    %v950 = vpop.f32.mrb[0].mxu0
    %v951 = vadd.f32 %v806, %v950
    %v952 = vpop.f32.mrb[0].mxu0
    %953 = vdwg.mxu0
    %v954 = vld [vmem:[%s9] sm:$0x1]
    %v956 = vlaneseq
    %v957 = vshrl.u32 %v956, 7
    %v958 = vsub.s32 0, %v957
    %v959 = vrot.slane %v954, %v958
    %v961 = vadd.f32 %v892, %v959
    %v962 = vadd.f32 %v895, %v959
    %v963 = vadd.f32 %v900, %v959
    %v964 = vadd.f32 %v903, %v959
    %v965 = vadd.f32 %v908, %v959
    %v966 = vadd.f32 %v911, %v959
    %v967 = vadd.f32 %v916, %v959
    %v968 = vadd.f32 %v919, %v959
    %v969 = vadd.f32 %v924, %v959
    %v970 = vadd.f32 %v927, %v959
    %v971 = vadd.f32 %v932, %v959
    %v972 = vadd.f32 %v935, %v959
    %v973 = vadd.f32 %v940, %v959
    %v974 = vadd.f32 %v943, %v959
    %v975 = vadd.f32 %v948, %v959
    %v976 = vadd.f32 %v951, %v959
    %v977 = vmax.f32 %v961, 0.0
    %v978 = vmax.f32 %v962, 0.0
    %v979 = vmax.f32 %v963, 0.0
    %v980 = vmax.f32 %v964, 0.0
    %v981 = vmax.f32 %v965, 0.0
    %v982 = vmax.f32 %v966, 0.0
    %v983 = vmax.f32 %v967, 0.0
    %v984 = vmax.f32 %v968, 0.0
    %v985 = vmax.f32 %v969, 0.0
    %v986 = vmax.f32 %v970, 0.0
    %v987 = vmax.f32 %v971, 0.0
    %v988 = vmax.f32 %v972, 0.0
    %v989 = vmax.f32 %v973, 0.0
    %v990 = vmax.f32 %v974, 0.0
    %v991 = vmax.f32 %v975, 0.0
    %v992 = vmax.f32 %v976, 0.0
    %v993 = vpack.c.bf16 %v978, %v977
    %v994 = vpack.c.bf16 %v980, %v979
    %v995 = vpack.c.bf16 %v982, %v981
    %v996 = vpack.c.bf16 %v984, %v983
    %v997 = vpack.c.bf16 %v986, %v985
    %v998 = vpack.c.bf16 %v988, %v987
    %v999 = vpack.c.bf16 %v990, %v989
    %v1000 = vpack.c.bf16 %v992, %v991
    %v1001 = vld [vmem:[%s3] sm:$0xff]
    %v1002 = vld [vmem:[%s3 + $0x8] sm:$0xff]
    %v1003 = vld [vmem:[%s3 + $0x10] sm:$0xff]
    %v1004 = vld [vmem:[%s3 + $0x18] sm:$0xff]
    %v1005 = vld [vmem:[%s3 + $0x20] sm:$0xff]
    %v1006 = vld [vmem:[%s3 + $0x28] sm:$0xff]
    %v1007 = vld [vmem:[%s3 + $0x30] sm:$0xff]
    %v1008 = vld [vmem:[%s3 + $0x38] sm:$0xff]
    %v1009 = vld [vmem:[%s3 + $0x40] sm:$0xff]
    %v1010 = vld [vmem:[%s3 + $0x48] sm:$0xff]
    %v1011 = vld [vmem:[%s3 + $0x50] sm:$0xff]
    %v1012 = vld [vmem:[%s3 + $0x58] sm:$0xff]
    %v1013 = vld [vmem:[%s3 + $0x60] sm:$0xff]
    %v1014 = vld [vmem:[%s3 + $0x68] sm:$0xff]
    %v1015 = vld [vmem:[%s3 + $0x70] sm:$0xff]
    %v1016 = vld [vmem:[%s3 + $0x78] sm:$0xff]
    %v1017 = vld [vmem:[%s4] sm:$0x1]
    %v1018 = vld [vmem:[%s5] sm:$0xff]
    %v1019 = vld [vmem:[%s5 + $0x8] sm:$0xff]
    %1020 = vset.pattern.permute.xlu0 0
    %1021 = vperm.xlu0 %1020, %v1001
    %v1022 = vpop.permute.xlu0 %1021
    %1023 = vset.pattern.permute.xlu0 0
    %1024 = vperm.xlu0 %1023, %v1002
    %v1025 = vpop.permute.xlu0 %1024
    %1026 = vset.pattern.permute.xlu0 0
    %1027 = vperm.xlu0 %1026, %v1003
    %v1028 = vpop.permute.xlu0 %1027
    %1029 = vset.pattern.permute.xlu0 0
    %1030 = vperm.xlu0 %1029, %v1004
    %v1031 = vpop.permute.xlu0 %1030
    %1032 = vset.pattern.permute.xlu0 0
    %1033 = vperm.xlu0 %1032, %v1005
    %v1034 = vpop.permute.xlu0 %1033
    %1035 = vset.pattern.permute.xlu0 0
    %1036 = vperm.xlu0 %1035, %v1006
    %v1037 = vpop.permute.xlu0 %1036
    %1038 = vset.pattern.permute.xlu0 0
    %1039 = vperm.xlu0 %1038, %v1007
    %v1040 = vpop.permute.xlu0 %1039
    %1041 = vset.pattern.permute.xlu0 0
    %1042 = vperm.xlu0 %1041, %v1008
    %v1043 = vpop.permute.xlu0 %1042
    %1044 = vset.pattern.permute.xlu0 0
    %1045 = vperm.xlu0 %1044, %v1009
    %v1046 = vpop.permute.xlu0 %1045
    %1047 = vset.pattern.permute.xlu0 0
    %1048 = vperm.xlu0 %1047, %v1010
    %v1049 = vpop.permute.xlu0 %1048
    %1050 = vset.pattern.permute.xlu0 0
    %1051 = vperm.xlu0 %1050, %v1011
    %v1052 = vpop.permute.xlu0 %1051
    %1053 = vset.pattern.permute.xlu0 0
    %1054 = vperm.xlu0 %1053, %v1012
    %v1055 = vpop.permute.xlu0 %1054
    %1056 = vset.pattern.permute.xlu0 0
    %1057 = vperm.xlu0 %1056, %v1013
    %v1058 = vpop.permute.xlu0 %1057
    %1059 = vset.pattern.permute.xlu0 0
    %1060 = vperm.xlu0 %1059, %v1014
    %v1061 = vpop.permute.xlu0 %1060
    %1062 = vset.pattern.permute.xlu0 0
    %1063 = vperm.xlu0 %1062, %v1015
    %v1064 = vpop.permute.xlu0 %1063
    %1065 = vset.pattern.permute.xlu0 0
    %1066 = vperm.xlu0 %1065, %v1016
    %v1067 = vpop.permute.xlu0 %1066
    %vm1068 = vcmp.eq.s32.totalorder %v1022, %v96
    %vm1069 = vcmp.eq.s32.totalorder %v1025, %v96
    %vm1070 = vcmp.eq.s32.totalorder %v1028, %v96
    %vm1071 = vcmp.eq.s32.totalorder %v1031, %v96
    %vm1072 = vcmp.eq.s32.totalorder %v1034, %v96
    %vm1073 = vcmp.eq.s32.totalorder %v1037, %v96
    %vm1074 = vcmp.eq.s32.totalorder %v1040, %v96
    %vm1075 = vcmp.eq.s32.totalorder %v1043, %v96
    %vm1076 = vcmp.eq.s32.totalorder %v1046, %v96
    %vm1077 = vcmp.eq.s32.totalorder %v1049, %v96
    %vm1078 = vcmp.eq.s32.totalorder %v1052, %v96
    %vm1079 = vcmp.eq.s32.totalorder %v1055, %v96
    %vm1080 = vcmp.eq.s32.totalorder %v1058, %v96
    %vm1081 = vcmp.eq.s32.totalorder %v1061, %v96
    %vm1082 = vcmp.eq.s32.totalorder %v1064, %v96
    %vm1083 = vcmp.eq.s32.totalorder %v1067, %v96
    %v1084 = vsel %vm1068, 1, 0
    %v1085 = vsel %vm1069, 1, 0
    %v1086 = vsel %vm1070, 1, 0
    %v1087 = vsel %vm1071, 1, 0
    %v1088 = vsel %vm1072, 1, 0
    %v1089 = vsel %vm1073, 1, 0
    %v1090 = vsel %vm1074, 1, 0
    %v1091 = vsel %vm1075, 1, 0
    %v1092 = vsel %vm1076, 1, 0
    %v1093 = vsel %vm1077, 1, 0
    %v1094 = vsel %vm1078, 1, 0
    %v1095 = vsel %vm1079, 1, 0
    %v1096 = vsel %vm1080, 1, 0
    %v1097 = vsel %vm1081, 1, 0
    %v1098 = vsel %vm1082, 1, 0
    %v1099 = vsel %vm1083, 1, 0
    %v1100 = vcvt.s32.f32 %v1084
    %v1101 = vcvt.s32.f32 %v1085
    %v1102 = vcvt.s32.f32 %v1086
    %v1103 = vcvt.s32.f32 %v1087
    %v1104 = vcvt.s32.f32 %v1088
    %v1105 = vcvt.s32.f32 %v1089
    %v1106 = vcvt.s32.f32 %v1090
    %v1107 = vcvt.s32.f32 %v1091
    %v1108 = vcvt.s32.f32 %v1092
    %v1109 = vcvt.s32.f32 %v1093
    %v1110 = vcvt.s32.f32 %v1094
    %v1111 = vcvt.s32.f32 %v1095
    %v1112 = vcvt.s32.f32 %v1096
    %v1113 = vcvt.s32.f32 %v1097
    %v1114 = vcvt.s32.f32 %v1098
    %v1115 = vcvt.s32.f32 %v1099
    %v1116 = vpack.c.bf16 %v1101, %v1100
    %v1117 = vpack.c.bf16 %v1103, %v1102
    %v1118 = vpack.c.bf16 %v1105, %v1104
    %v1119 = vpack.c.bf16 %v1107, %v1106
    %v1120 = vpack.c.bf16 %v1109, %v1108
    %v1121 = vpack.c.bf16 %v1111, %v1110
    %v1122 = vpack.c.bf16 %v1113, %v1112
    %v1123 = vpack.c.bf16 %v1115, %v1114
    %v1124 = vlaneseq
    %v1125 = vshrl.u32 %v1124, 7
    %v1126 = vsub.s32 0, %v1125
    %v1127 = vrot.slane %v1017, %v1126
    %vm1128 = vcmp.eq.s32.totalorder %v1127, %v202
    %vm1129 = vcmp.eq.s32.totalorder %v1127, %v203
    %v1130 = vsel %vm1128, 1, 0
    %v1131 = vsel %vm1129, 1, 0
    %v1132 = vcvt.s32.f32 %v1130
    %v1133 = vcvt.s32.f32 %v1131
    %v1134 = vpack.c.bf16 %v1133, %v1132
    %1135 = vmatprep.subr.bf16.mxu0 0
    %1136 = vmatpush1.bf16.msra.mxu0 %v993
    %1137 = vmatprep.subr.bf16.mxu0 0
    %1138 = vmatpush1.bf16.msra.mxu0 %v994
    %1139 = vmatprep.subr.bf16.mxu0 0
    %1140 = vmatpush1.bf16.msra.mxu0 %v995
    %1141 = vmatprep.subr.bf16.mxu0 0
    %1142 = vmatpush1.bf16.msra.mxu0 %v996
    %1143 = vmatprep.subr.bf16.mxu0 0
    %1144 = vmatpush1.bf16.msra.mxu0 %v997
    %1145 = vmatprep.subr.bf16.mxu0 0
    %1146 = vmatpush1.bf16.msra.mxu0 %v998
    %1147 = vmatprep.subr.bf16.mxu0 0
    %1148 = vmatpush1.bf16.msra.mxu0 %v999
    %1149 = vmatprep.subr.bf16.mxu0 0
    %1150 = vmatpush1.bf16.msra.mxu0 %v1000
    %1151 = vmatprep.subr.bf16.mxu0 0
    %1152 = vmatpush1.bf16.msra.mxu0 0
    %1153 = vmatprep.subr.bf16.mxu0 0
    %1154 = vmatpush1.bf16.msra.mxu0 0
    %1155 = vmatprep.subr.bf16.mxu0 0
    %1156 = vmatpush1.bf16.msra.mxu0 0
    %1157 = vmatprep.subr.bf16.mxu0 0
    %1158 = vmatpush1.bf16.msra.mxu0 0
    %1159 = vmatprep.subr.bf16.mxu0 0
    %1160 = vmatpush1.bf16.msra.mxu0 0
    %1161 = vmatprep.subr.bf16.mxu0 0
    %1162 = vmatpush1.bf16.msra.mxu0 0
    %1163 = vmatprep.subr.bf16.mxu0 0
    %1164 = vmatpush1.bf16.msra.mxu0 0
    %1165 = vmatprep.subr.bf16.mxu0 0
    %1166 = vmatpush1.bf16.msra.mxu0 0
    %1167 = vmatprep.mubr.bf16.mxu0 0
    %1168 = vmatmul.mubr.bf16.gmra.mrb[0].mxu0 %v1116
    %v1169 = vpop.f32.mrb[0].mxu0
    %v1170 = vadd.f32 0.0, %v1169
    %v1171 = vpop.f32.mrb[0].mxu0
    %v1172 = vpop.f32.mrb[0].mxu0
    %v1173 = vadd.f32 0.0, %v1172
    %v1174 = vpop.f32.mrb[0].mxu0
    %1175 = vmatprep.mubr.bf16.mxu0 0
    %1176 = vmatmul.mubr.bf16.gmra.mrb[0].mxu0 %v1117
    %v1177 = vpop.f32.mrb[0].mxu0
    %v1178 = vadd.f32 0.0, %v1177
    %v1179 = vpop.f32.mrb[0].mxu0
    %v1180 = vpop.f32.mrb[0].mxu0
    %v1181 = vadd.f32 0.0, %v1180
    %v1182 = vpop.f32.mrb[0].mxu0
    %1183 = vmatprep.mubr.bf16.mxu0 0
    %1184 = vmatmul.mubr.bf16.gmra.mrb[0].mxu0 %v1118
    %v1185 = vpop.f32.mrb[0].mxu0
    %v1186 = vadd.f32 0.0, %v1185
    %v1187 = vpop.f32.mrb[0].mxu0
    %v1188 = vpop.f32.mrb[0].mxu0
    %v1189 = vadd.f32 0.0, %v1188
    %v1190 = vpop.f32.mrb[0].mxu0
    %1191 = vmatprep.mubr.bf16.mxu0 0
    %1192 = vmatmul.mubr.bf16.gmra.mrb[0].mxu0 %v1119
    %v1193 = vpop.f32.mrb[0].mxu0
    %v1194 = vadd.f32 0.0, %v1193
    %v1195 = vpop.f32.mrb[0].mxu0
    %v1196 = vpop.f32.mrb[0].mxu0
    %v1197 = vadd.f32 0.0, %v1196
    %v1198 = vpop.f32.mrb[0].mxu0
    %1199 = vmatprep.mubr.bf16.mxu0 0
    %1200 = vmatmul.mubr.bf16.gmra.mrb[0].mxu0 %v1120
    %v1201 = vpop.f32.mrb[0].mxu0
    %v1202 = vadd.f32 0.0, %v1201
    %v1203 = vpop.f32.mrb[0].mxu0
    %v1204 = vpop.f32.mrb[0].mxu0
    %v1205 = vadd.f32 0.0, %v1204
    %v1206 = vpop.f32.mrb[0].mxu0
    %1207 = vmatprep.mubr.bf16.mxu0 0
    %1208 = vmatmul.mubr.bf16.gmra.mrb[0].mxu0 %v1121
    %v1209 = vpop.f32.mrb[0].mxu0
    %v1210 = vadd.f32 0.0, %v1209
    %v1211 = vpop.f32.mrb[0].mxu0
    %v1212 = vpop.f32.mrb[0].mxu0
    %v1213 = vadd.f32 0.0, %v1212
    %v1214 = vpop.f32.mrb[0].mxu0
    %1215 = vmatprep.mubr.bf16.mxu0 0
    %1216 = vmatmul.mubr.bf16.gmra.mrb[0].mxu0 %v1122
    %v1217 = vpop.f32.mrb[0].mxu0
    %v1218 = vadd.f32 0.0, %v1217
    %v1219 = vpop.f32.mrb[0].mxu0
    %v1220 = vpop.f32.mrb[0].mxu0
    %v1221 = vadd.f32 0.0, %v1220
    %v1222 = vpop.f32.mrb[0].mxu0
    %1223 = vmatprep.mubr.bf16.mxu0 0
    %1224 = vmatmul.mubr.bf16.gmra.mrb[0].mxu0 %v1123
    %v1225 = vpop.f32.mrb[0].mxu0
    %v1226 = vadd.f32 0.0, %v1225
    %v1227 = vpop.f32.mrb[0].mxu0
    %v1228 = vpop.f32.mrb[0].mxu0
    %v1229 = vadd.f32 0.0, %v1228
    %v1230 = vpop.f32.mrb[0].mxu0
    %1231 = vdwg.mxu0
    %v1232 = vpack.c.bf16 %v1173, %v1170
    %v1233 = vpack.c.bf16 %v1181, %v1178
    %v1234 = vpack.c.bf16 %v1189, %v1186
    %v1235 = vpack.c.bf16 %v1197, %v1194
    %v1236 = vpack.c.bf16 %v1205, %v1202
    %v1237 = vpack.c.bf16 %v1213, %v1210
    %v1238 = vpack.c.bf16 %v1221, %v1218
    %v1239 = vpack.c.bf16 %v1229, %v1226
    %1240 = vmatprep.subr.bf16.mxu0 0
    %1241 = vmatpush1.bf16.msra.mxu0 %v1232
    %1242 = vmatprep.subr.bf16.mxu0 0
    %1243 = vmatpush1.bf16.msra.mxu0 %v1233
    %1244 = vmatprep.subr.bf16.mxu0 0
    %1245 = vmatpush1.bf16.msra.mxu0 %v1234
    %1246 = vmatprep.subr.bf16.mxu0 0
    %1247 = vmatpush1.bf16.msra.mxu0 %v1235
    %1248 = vmatprep.subr.bf16.mxu0 0
    %1249 = vmatpush1.bf16.msra.mxu0 %v1236
    %1250 = vmatprep.subr.bf16.mxu0 0
    %1251 = vmatpush1.bf16.msra.mxu0 %v1237
    %1252 = vmatprep.subr.bf16.mxu0 0
    %1253 = vmatpush1.bf16.msra.mxu0 %v1238
    %1254 = vmatprep.subr.bf16.mxu0 0
    %1255 = vmatpush1.bf16.msra.mxu0 %v1239
    %1256 = vmatprep.subr.bf16.mxu0 0
    %1257 = vmatpush1.bf16.msra.mxu0 0
    %1258 = vmatprep.subr.bf16.mxu0 0
    %1259 = vmatpush1.bf16.msra.mxu0 0
    %1260 = vmatprep.subr.bf16.mxu0 0
    %1261 = vmatpush1.bf16.msra.mxu0 0
    %1262 = vmatprep.subr.bf16.mxu0 0
    %1263 = vmatpush1.bf16.msra.mxu0 0
    %1264 = vmatprep.subr.bf16.mxu0 0
    %1265 = vmatpush1.bf16.msra.mxu0 0
    %1266 = vmatprep.subr.bf16.mxu0 0
    %1267 = vmatpush1.bf16.msra.mxu0 0
    %1268 = vmatprep.subr.bf16.mxu0 0
    %1269 = vmatpush1.bf16.msra.mxu0 0
    %1270 = vmatprep.subr.bf16.mxu0 0
    %1271 = vmatpush1.bf16.msra.mxu0 0
    %1272 = vmatprep.mubr.bf16.mxu0 0
    %1273 = vmatmul.mubr.bf16.gmra.mrb[0].mxu0 %v1134
    %v1274 = vpop.f32.mrb[0].mxu0
    %v1275 = vadd.f32 0.0, %v1274
    %v1276 = vpop.f32.mrb[0].mxu0
    %v1277 = vpop.f32.mrb[0].mxu0
    %v1278 = vadd.f32 0.0, %v1277
    %v1279 = vpop.f32.mrb[0].mxu0
    %1280 = vdwg.mxu0
    %1282 = vset.pattern.permute.xlu0 0
    %1283 = vperm.xlu0 %1282, %v1018
    %v1284 = vpop.permute.xlu0 %1283
    %1287 = vset.pattern.permute.xlu0 0
    %1288 = vperm.xlu0 %1287, %v1019
    %v1289 = vpop.permute.xlu0 %1288
    %v1291 = vmul.f32 %v1275, %v1284
    %v1292 = vmul.f32 %v1278, %v1289
    %v1293 = vpack.c.bf16 %v1292, %v1291
    %v1294 = vld [vmem:[%s10] sm:$0xf]
    %v1295 = vld [vmem:[%s10 + $0x4] sm:$0xf]
    %v1296 = vld [vmem:[%s10 + $0x8] sm:$0xf]
    %v1297 = vld [vmem:[%s10 + $0xc] sm:$0xf]
    %v1298 = vld [vmem:[%s10 + $0x10] sm:$0xf]
    %v1299 = vld [vmem:[%s10 + $0x14] sm:$0xf]
    %v1300 = vld [vmem:[%s10 + $0x18] sm:$0xf]
    %v1301 = vld [vmem:[%s10 + $0x1c] sm:$0xf]
    %v1302 = vld [vmem:[%s10 + $0x20] sm:$0xf]
    %v1303 = vld [vmem:[%s10 + $0x24] sm:$0xf]
    %v1304 = vld [vmem:[%s10 + $0x28] sm:$0xf]
    %v1305 = vld [vmem:[%s10 + $0x2c] sm:$0xf]
    %v1306 = vld [vmem:[%s10 + $0x30] sm:$0xf]
    %v1307 = vld [vmem:[%s10 + $0x34] sm:$0xf]
    %v1308 = vld [vmem:[%s10 + $0x38] sm:$0xf]
    %v1309 = vld [vmem:[%s10 + $0x3c] sm:$0xf]
    %v1310 = vld [vmem:[%s11] sm:$0xf]
    %v1311 = vld [vmem:[%s11 + $0x4] sm:$0xf]
    %v1312 = vld [vmem:[%s11 + $0x8] sm:$0xf]
    %v1313 = vld [vmem:[%s11 + $0xc] sm:$0xf]
    %v1314 = vld [vmem:[%s11 + $0x10] sm:$0xf]
    %v1315 = vld [vmem:[%s11 + $0x14] sm:$0xf]
    %v1316 = vld [vmem:[%s11 + $0x18] sm:$0xf]
    %v1317 = vld [vmem:[%s11 + $0x1c] sm:$0xf]
    %v1318 = vld [vmem:[%s11 + $0x20] sm:$0xf]
    %v1319 = vld [vmem:[%s11 + $0x24] sm:$0xf]
    %v1320 = vld [vmem:[%s11 + $0x28] sm:$0xf]
    %v1321 = vld [vmem:[%s11 + $0x2c] sm:$0xf]
    %v1322 = vld [vmem:[%s11 + $0x30] sm:$0xf]
    %v1323 = vld [vmem:[%s11 + $0x34] sm:$0xf]
    %v1324 = vld [vmem:[%s11 + $0x38] sm:$0xf]
    %v1325 = vld [vmem:[%s11 + $0x3c] sm:$0xf]
    %v1342 = vunpack.c.l.b16 %v1310
    %v1343 = vunpack.c.l.b16 %v1311
    %v1344 = vunpack.c.l.b16 %v1312
    %v1345 = vunpack.c.l.b16 %v1313
    %v1346 = vunpack.c.l.b16 %v1314
    %v1347 = vunpack.c.l.b16 %v1315
    %v1348 = vunpack.c.l.b16 %v1316
    %v1349 = vunpack.c.l.b16 %v1317
    %v1350 = vunpack.c.l.b16 %v1318
    %v1351 = vunpack.c.l.b16 %v1319
    %v1352 = vunpack.c.l.b16 %v1320
    %v1353 = vunpack.c.l.b16 %v1321
    %v1354 = vunpack.c.l.b16 %v1322
    %v1355 = vunpack.c.l.b16 %v1323
    %v1356 = vunpack.c.l.b16 %v1324
    %v1357 = vunpack.c.l.b16 %v1325
    %v1358 = vpack.c.b16 %v1343, %v1342
    %v1359 = vpack.c.b16 %v1345, %v1344
    %v1360 = vpack.c.b16 %v1347, %v1346
    %v1361 = vpack.c.b16 %v1349, %v1348
    %v1362 = vpack.c.b16 %v1351, %v1350
    %v1363 = vpack.c.b16 %v1353, %v1352
    %v1364 = vpack.c.b16 %v1355, %v1354
    %v1365 = vpack.c.b16 %v1357, %v1356
    %1374 = vmatprep.subr.bf16.mxu0 0
    %1375 = vmatpush1.bf16.msra.mxu0 %v1358
    %1376 = vmatprep.subr.bf16.mxu0 0
    %1377 = vmatpush1.bf16.msra.mxu0 %v1359
    %1378 = vmatprep.subr.bf16.mxu0 0
    %1379 = vmatpush1.bf16.msra.mxu0 %v1360
    %1380 = vmatprep.subr.bf16.mxu0 0
    %1381 = vmatpush1.bf16.msra.mxu0 %v1361
    %1382 = vmatprep.subr.bf16.mxu0 0
    %1383 = vmatpush1.bf16.msra.mxu0 %v1362
    %1384 = vmatprep.subr.bf16.mxu0 0
    %1385 = vmatpush1.bf16.msra.mxu0 %v1363
    %1386 = vmatprep.subr.bf16.mxu0 0
    %1387 = vmatpush1.bf16.msra.mxu0 %v1364
    %1388 = vmatprep.subr.bf16.mxu0 0
    %1389 = vmatpush1.bf16.msra.mxu0 %v1365
    %1390 = vmatprep.subr.bf16.mxu0 0
    %1391 = vmatpush1.bf16.msra.mxu0 0
    %1392 = vmatprep.subr.bf16.mxu0 0
    %1393 = vmatpush1.bf16.msra.mxu0 0
    %1394 = vmatprep.subr.bf16.mxu0 0
    %1395 = vmatpush1.bf16.msra.mxu0 0
    %1396 = vmatprep.subr.bf16.mxu0 0
    %1397 = vmatpush1.bf16.msra.mxu0 0
    %1398 = vmatprep.subr.bf16.mxu0 0
    %1399 = vmatpush1.bf16.msra.mxu0 0
    %1400 = vmatprep.subr.bf16.mxu0 0
    %1401 = vmatpush1.bf16.msra.mxu0 0
    %1402 = vmatprep.subr.bf16.mxu0 0
    %1403 = vmatpush1.bf16.msra.mxu0 0
    %1404 = vmatprep.subr.bf16.mxu0 0
    %1405 = vmatpush1.bf16.msra.mxu0 0
    %1406 = vmatprep.mubr.bf16.mxu0 0
    %1407 = vmatmul.mubr.bf16.gmra.mrb[0].mxu0 %v993
    %v1408 = vpop.f32.mrb[0].mxu0
    %v1409 = vadd.f32 0.0, %v1408
    %v1410 = vpop.f32.mrb[0].mxu0
    %v1411 = vpop.f32.mrb[0].mxu0
    %v1412 = vadd.f32 0.0, %v1411
    %v1413 = vpop.f32.mrb[0].mxu0
    %1414 = vdwg.mxu0
    %v1431 = vunpack.c.l.b16 %v1294
    %v1432 = vunpack.c.l.b16 %v1295
    %v1433 = vunpack.c.l.b16 %v1296
    %v1434 = vunpack.c.l.b16 %v1297
    %v1435 = vunpack.c.l.b16 %v1298
    %v1436 = vunpack.c.l.b16 %v1299
    %v1437 = vunpack.c.l.b16 %v1300
    %v1438 = vunpack.c.l.b16 %v1301
    %v1439 = vunpack.c.l.b16 %v1302
    %v1440 = vunpack.c.l.b16 %v1303
    %v1441 = vunpack.c.l.b16 %v1304
    %v1442 = vunpack.c.l.b16 %v1305
    %v1443 = vunpack.c.l.b16 %v1306
    %v1444 = vunpack.c.l.b16 %v1307
    %v1445 = vunpack.c.l.b16 %v1308
    %v1446 = vunpack.c.l.b16 %v1309
    %v1447 = vpack.c.b16 %v1432, %v1431
    %v1448 = vpack.c.b16 %v1434, %v1433
    %v1449 = vpack.c.b16 %v1436, %v1435
    %v1450 = vpack.c.b16 %v1438, %v1437
    %v1451 = vpack.c.b16 %v1440, %v1439
    %v1452 = vpack.c.b16 %v1442, %v1441
    %v1453 = vpack.c.b16 %v1444, %v1443
    %v1454 = vpack.c.b16 %v1446, %v1445
    %1463 = vmatprep.subr.bf16.mxu0 0
    %1464 = vmatpush1.bf16.msra.mxu0 %v1447
    %1465 = vmatprep.subr.bf16.mxu0 0
    %1466 = vmatpush1.bf16.msra.mxu0 %v1448
    %1467 = vmatprep.subr.bf16.mxu0 0
    %1468 = vmatpush1.bf16.msra.mxu0 %v1449
    %1469 = vmatprep.subr.bf16.mxu0 0
    %1470 = vmatpush1.bf16.msra.mxu0 %v1450
    %1471 = vmatprep.subr.bf16.mxu0 0
    %1472 = vmatpush1.bf16.msra.mxu0 %v1451
    %1473 = vmatprep.subr.bf16.mxu0 0
    %1474 = vmatpush1.bf16.msra.mxu0 %v1452
    %1475 = vmatprep.subr.bf16.mxu0 0
    %1476 = vmatpush1.bf16.msra.mxu0 %v1453
    %1477 = vmatprep.subr.bf16.mxu0 0
    %1478 = vmatpush1.bf16.msra.mxu0 %v1454
    %1479 = vmatprep.subr.bf16.mxu0 0
    %1480 = vmatpush1.bf16.msra.mxu0 0
    %1481 = vmatprep.subr.bf16.mxu0 0
    %1482 = vmatpush1.bf16.msra.mxu0 0
    %1483 = vmatprep.subr.bf16.mxu0 0
    %1484 = vmatpush1.bf16.msra.mxu0 0
    %1485 = vmatprep.subr.bf16.mxu0 0
    %1486 = vmatpush1.bf16.msra.mxu0 0
    %1487 = vmatprep.subr.bf16.mxu0 0
    %1488 = vmatpush1.bf16.msra.mxu0 0
    %1489 = vmatprep.subr.bf16.mxu0 0
    %1490 = vmatpush1.bf16.msra.mxu0 0
    %1491 = vmatprep.subr.bf16.mxu0 0
    %1492 = vmatpush1.bf16.msra.mxu0 0
    %1493 = vmatprep.subr.bf16.mxu0 0
    %1494 = vmatpush1.bf16.msra.mxu0 0
    %1495 = vmatprep.mubr.bf16.mxu0 0
    %1496 = vmatmul.mubr.bf16.gmra.mrb[0].mxu0 %v1293
    %v1497 = vpop.f32.mrb[0].mxu0
    %v1498 = vadd.f32 %v1409, %v1497
    %v1499 = vpop.f32.mrb[0].mxu0
    %v1500 = vpop.f32.mrb[0].mxu0
    %v1501 = vadd.f32 %v1412, %v1500
    %v1502 = vpop.f32.mrb[0].mxu0
    %1503 = vdwg.mxu0
    %v1504 = vld [vmem:[%s12] sm:$0x1]
    %v1506 = vlaneseq
    %v1507 = vshrl.u32 %v1506, 7
    %v1508 = vsub.s32 0, %v1507
    %v1509 = vrot.slane %v1504, %v1508
    %v1511 = vadd.f32 %v1498, %v1509
    %v1512 = vadd.f32 %v1501, %v1509
    %vm1513 = vcmp.lt.s32.totalorder %v96, 16
    %v1514 = vsel %vm1513, %v1511, -1e+30
    %v1515 = vsel %vm1513, %v1512, -1e+30
    %1516 = vmax.xlane.f32.xlu0 %v1514
    %v1517 = vpop.xlane.xlu0 %1516
    %1518 = vmax.xlane.f32.xlu0 %v1515
    %v1519 = vpop.xlane.xlu0 %1518
    %v1520 = vsub.f32 %v1514, %v1517
    %v1521 = vsub.f32 %v1515, %v1519
    %v1522 = vmul.f32 %v1520, 1.442695
    %v1523 = vpow.pop %v1522
    %v1524 = vmul.f32 %v1521, 1.442695
    %v1525 = vpow.pop %v1524
    %1526 = vadd.xlane.f32.xlu0 %v1523
    %v1527 = vpop.xlane.xlu0 %1526
    %1528 = vadd.xlane.f32.xlu0 %v1525
    %v1529 = vpop.xlane.xlu0 %1528
    %v1530 = vlog2.pop %v1527
    %v1531 = vmul.f32 %v1530, 0.6931472
    %v1532 = vlog2.pop %v1529
    %v1533 = vmul.f32 %v1532, 0.6931472
    %v1534 = vadd.f32 %v1517, %v1531
    %v1535 = vadd.f32 %v1519, %v1533
    %v1536 = vsub.f32 %v1514, %v1534
    %v1537 = vsub.f32 %v1515, %v1535
    %1538 = vst [vmem:[#allocation2] sm:$0xff] %v1536
    %1539 = vst [vmem:[#allocation2 + $0x8] sm:$0xff] %v1537
    // Predicated region
    $region54: #{tpu_custom_call.1} parent=1 // pred_check
      _
    $region55: #{tpu_custom_call.1} parent=1 // pred_check_branch
      %1541 = sbr.rel (0) target = $region57
    $region56: #{tpu_custom_call.1} parent=1 // pred_region
      %s1543 = ssub.s32 256, 256
      %1544 = vsyncadd [#allocation3], %s1543
      %s1545 = sshll.u32 [#allocation2], 4
      %s1546 = int_to_ptr.vmem [resolvable:$true] %s1545
      %1551 = dma.vmem_to_hbm [thread:$0]  %s1546, 256, %s13, [#allocation3], 128, 128, 8
    $region57: #{tpu_custom_call.1} parent=1 // pred_fallthru
      _
    // Predicated region
    $region58: #{tpu_custom_call.1} parent=1 // pred_check
      _
    $region59: #{tpu_custom_call.1} parent=1 // pred_check_branch
      %1553 = sbr.rel (0) target = $region61
    $region60: #{tpu_custom_call.1} parent=1 // pred_region
      %1554 = dma.done [#allocation3], 256
    $region61: #{tpu_custom_call.1} parent=1 // pred_fallthru
      _
    %1555 = vsyncpa [#allocation3], 1

</llo_original>
